<compile_context>
chip_gen: v5e
topology: v5e:2x2
jax: 0.10.0
libtpu: 0.0.40
codegen_flags: <defaults>
</compile_context>

<pallas_src>
import functools

import jax
import jax.numpy as jnp
from jax.experimental import pallas as pl
from jax.experimental.pallas import tpu as pltpu


# ---------------------------------------------------------------------------
# Single fused kernel: conv/bn/relu/pool x2 -> BiLSTM -> attention-sum -> FC head
# ---------------------------------------------------------------------------
def _fused_forward_kernel(x_ref, w1_ref, s1_ref, w2_ref, s2_ref,
                          wih_ref, whhf_ref, whhb_ref, b_ref,
                          wfc1_ref, bfc1_ref, wfc2_ref, bfc2_ref,
                          logits_ref):
    def conv_bn_relu_pool(x, w_ref, shift):
        # x: (B, L, Cin) channels-last; w_ref: (3*Cin, Cout) bf16 im2col weights with the
        # eval-mode BN scale folded in; shift: (1, Cout) f32 = bn_shift + conv_bias*scale.
        Bc, Lc, Cin = x.shape
        Cout = w_ref.shape[-1]
        xb = x.astype(jnp.bfloat16)                                   # bf16 MXU operand
        z = jnp.zeros((Bc, 1, Cin), jnp.bfloat16)
        xpad = jnp.concatenate([z, xb, z], axis=1)                    # (B, L+2, Cin)
        # Single im2col GEMM per conv layer (taps [l-1, l, l+1] along the lane dim):
        # one MXU push with K=3*Cin instead of three K=Cin matmuls + partial-sum adds.
        patches = jnp.concatenate(
            [xpad[:, 0:Lc, :], xpad[:, 1:Lc + 1, :], xpad[:, 2:Lc + 2, :]], axis=-1)
        y = jnp.dot(patches.reshape(Bc * Lc, 3 * Cin), w_ref[...],
                    preferred_element_type=jnp.float32)
        y = jnp.maximum(y + shift, 0.0)                               # folded BN(eval)+ReLU
        # MaxPool1d(kernel_size=2): rows are b-major / l-minor and L is even, so adjacent
        # row pairs never cross a batch boundary.
        y = jnp.max(y.reshape(Bc * Lc // 2, 2, Cout), axis=1)
        return y.reshape(Bc, Lc // 2, Cout)

    h = conv_bn_relu_pool(x_ref[...], w1_ref, s1_ref[...])            # (B, L/2, 32)
    h = conv_bn_relu_pool(h, w2_ref, s2_ref[...])                     # (B, L/4, 64)

    B, T, F = h.shape
    H = whhf_ref.shape[0]
    H4 = 4 * H

    # Hoisted BiLSTM input projection (+ summed biases): ONE wide bf16 GEMM, f32 acc.
    xg = (jnp.dot(h.reshape(B * T, F).astype(jnp.bfloat16), wih_ref[...],
                  preferred_element_type=jnp.float32)
          + b_ref[...]).reshape(B, T, 2 * H4)

    # Pre-slice the per-step gate inputs outside the recurrence (loop is trace-time
    # unrolled) so only the two small matmuls + gate math sit on the serial chain.
    xg_f = [xg[:, t, :H4] for t in range(T)]           # forward direction, t = 0..T-1
    xg_b = [xg[:, T - 1 - t, H4:] for t in range(T)]   # backward direction, reversed time

    whh_f = whhf_ref[...]                               # (H, 4H) bf16
    whh_b = whhb_ref[...]

    hs_f = jnp.zeros((B, H), jnp.float32)
    cs_f = jnp.zeros((B, H), jnp.float32)
    hs_b = jnp.zeros((B, H), jnp.float32)
    cs_b = jnp.zeros((B, H), jnp.float32)
    ctx_f = jnp.zeros((B, H), jnp.float32)              # running sums over time
    ctx_b = jnp.zeros((B, H), jnp.float32)

    # T is tiny and static -> unrolled Python loop.
    # TODO(synk): for large T, keep whh resident in the MXU staging registers via
    # pltpu.matmul_push_rhs / matmul_acc_lhs and switch to lax.fori_loop(unroll=True).
    for t in range(T):
        # Per-direction recurrence matmuls (no wasted FLOPs, no per-step batch concat);
        # hs/cs stay f32, only the MXU operand is cast to bf16.
        g_f = xg_f[t] + jnp.dot(hs_f.astype(jnp.bfloat16), whh_f,
                                preferred_element_type=jnp.float32)
        g_b = xg_b[t] + jnp.dot(hs_b.astype(jnp.bfloat16), whh_b,
                                preferred_element_type=jnp.float32)
        # Gates packed host-side in [i, f, o, g] order: one sigmoid slab + one tanh.
        ifo_f = jax.nn.sigmoid(g_f[:, :3 * H])
        ifo_b = jax.nn.sigmoid(g_b[:, :3 * H])
        gg_f = jnp.tanh(g_f[:, 3 * H:])
        gg_b = jnp.tanh(g_b[:, 3 * H:])
        cs_f = ifo_f[:, H:2 * H] * cs_f + ifo_f[:, :H] * gg_f
        cs_b = ifo_b[:, H:2 * H] * cs_b + ifo_b[:, :H] * gg_b
        hs_f = ifo_f[:, 2 * H:3 * H] * jnp.tanh(cs_f)
        hs_b = ifo_b[:, 2 * H:3 * H] * jnp.tanh(cs_b)
        ctx_f = ctx_f + hs_f
        ctx_b = ctx_b + hs_b

    # Attention: Softmax(dim=1) on a (B*T, 1) tensor is identically 1.0, so
    # context == sum over time of the (B, T, 2H) BiLSTM output.
    context = jnp.concatenate([ctx_f, ctx_b], axis=-1)                # (B, 2H)

    h1 = jnp.maximum(
        jnp.dot(context.astype(jnp.bfloat16), wfc1_ref[...],
                preferred_element_type=jnp.float32) + bfc1_ref[...], 0.0)
    # num_classes (<128 lanes) lowers to a masked store; negligible at this output size.
    logits_ref[...] = (jnp.dot(h1.astype(jnp.bfloat16), wfc2_ref[...],
                               preferred_element_type=jnp.float32) + bfc2_ref[...])


# ---------------------------------------------------------------------------
# Generation-aware VMEM budgeting / batch tiling
# ---------------------------------------------------------------------------
def _vmem_budget_bytes():
    try:
        cap = pltpu.get_tpu_info().vmem_capacity_bytes    # 128 MiB v5e/v6e, 64 MiB v7x
    except Exception:
        cap = 64 * 1024 * 1024                            # conservative (v7x-sized) fallback
    # Leave headroom for double-buffering + compiler scratch.
    return int(min(cap // 2, 100 * 1024 * 1024))


def _pick_batch_tile(B, L, Cin, budget_bytes):
    # Rough per-batch-row f32 activation footprint across the fused pipeline
    # (conv stages + LSTM projection), with 8x slack for temporaries / double-buffering.
    per_row = 4 * (L * Cin + L * 32 + (L // 2) * 32 + (L // 2) * 64
                   + (L // 4) * 64 + (L // 4) * 128)
    cap = max(1, budget_bytes // (8 * per_row))
    tb = min(B, cap)
    while B % tb:                                         # exact divisor: no padded tiles
        tb -= 1
    return tb


# ---------------------------------------------------------------------------
# Wrapper: one layout transpose + one pallas_call + constant attention weights
# ---------------------------------------------------------------------------
def cnn_lstm_attention_forward(x, params, *, batch_tile=None):
    # x: (B, Cin, L) — same NCL convention as the PyTorch module.
    B, Cin, L = x.shape
    assert L % 4 == 0, "two MaxPool1d(k=2) stages require L divisible by 4"
    x_cl = jnp.transpose(x, (0, 2, 1))                                # (B, L, Cin)
    num_classes = params["w_fc2"].shape[-1]

    vmem_limit = _vmem_budget_bytes()
    tb = batch_tile or _pick_batch_tile(B, L, Cin, vmem_limit)
    assert B % tb == 0
    grid = (B // tb,)

    weight_names = ("w1", "s1", "w2", "s2", "wih", "whh_f", "whh_b", "bias",
                    "w_fc1", "b_fc1", "w_fc2", "b_fc2")
    in_specs = [pl.BlockSpec((tb, L, Cin), lambda b: (b, 0, 0))]
    # Weights are small 2-D tensors: full blocks with constant index maps (not re-fetched).
    in_specs += [pl.BlockSpec(params[k].shape, lambda b: (0, 0)) for k in weight_names]

    logits = pl.pallas_call(
        _fused_forward_kernel,
        out_shape=jax.ShapeDtypeStruct((B, num_classes), jnp.float32),
        grid=grid,
        in_specs=in_specs,
        out_specs=pl.BlockSpec((tb, num_classes), lambda b: (b, 0)),
        compiler_params=pltpu.CompilerParams(
            dimension_semantics=("parallel",),            # v7x: shard batch over both TCs
            vmem_limit_bytes=vmem_limit),
    )(x_cl, *(params[k] for k in weight_names))

    T = L // 4
    # Exact module semantics: softmax over a size-1 axis -> all-ones weights.
    attn_weights = jnp.ones((B, T, 1), jnp.float32)
    return logits, attn_weights


# ---------------------------------------------------------------------------
# Deterministic synthetic parameters (PyTorch layouts), repacked for the kernel
# ---------------------------------------------------------------------------
def init_params(key, input_dim=4, hidden_dim=32, num_classes=3):
    H = hidden_dim // 2
    ks = jax.random.split(key, 32)
    ki = iter(range(32))

    def n(shape, s=0.1):
        return s * jax.random.normal(ks[next(ki)], shape, jnp.float32)

    eps = 1e-5
    # conv1 / bn1 (PyTorch layouts)
    conv1_w = n((32, input_dim, 3)); conv1_b = n((32,))
    bn1_g = 1.0 + n((32,)); bn1_b = n((32,))
    bn1_m = n((32,)); bn1_v = 1.0 + 0.1 * jnp.abs(n((32,), 1.0))
    # conv2 / bn2
    conv2_w = n((64, 32, 3)); conv2_b = n((64,))
    bn2_g = 1.0 + n((64,)); bn2_b = n((64,))
    bn2_m = n((64,)); bn2_v = 1.0 + 0.1 * jnp.abs(n((64,), 1.0))
    # LSTM (bidirectional, 1 layer), PyTorch gate order [i, f, g, o]
    wih_f = n((4 * H, 64)); whh_f = n((4 * H, H))
    bih_f = n((4 * H,));    bhh_f = n((4 * H,))
    wih_b = n((4 * H, 64)); whh_b = n((4 * H, H))
    bih_b = n((4 * H,));    bhh_b = n((4 * H,))
    # Attention MLP parameters exist in the module but are dead compute
    # (Softmax(dim=1) over a size-1 axis makes its output identically 1.0).
    _wa1 = n((64, hidden_dim)); _ba1 = n((64,))
    _wa2 = n((1, 64));          _ba2 = n((1,))
    # FC head
    fc1_w = n((H, hidden_dim)); fc1_b = n((H,))
    fc2_w = n((num_classes, H)); fc2_b = n((num_classes,))

    # Fold eval-mode BatchNorm1d scale into the conv weights, and (conv bias + BN shift)
    # into a single per-channel shift.
    bn1_scale = bn1_g / jnp.sqrt(bn1_v + eps)
    bn1_shift = bn1_b - bn1_m * bn1_scale
    bn2_scale = bn2_g / jnp.sqrt(bn2_v + eps)
    bn2_shift = bn2_b - bn2_m * bn2_scale

    # Im2col weight layout: row index = tap*Cin + cin, taps ordered [l-1, l, l+1].
    w1 = (jnp.transpose(conv1_w, (2, 1, 0)) * bn1_scale).reshape(3 * input_dim, 32)
    s1 = (bn1_shift + conv1_b * bn1_scale).reshape(1, -1)
    w2 = (jnp.transpose(conv2_w, (2, 1, 0)) * bn2_scale).reshape(3 * 32, 64)
    s2 = (bn2_shift + conv2_b * bn2_scale).reshape(1, -1)

    # LSTM packing: reorder gates [i,f,g,o] -> [i,f,o,g]; input projection weights are
    # concatenated across directions (one wide GEMM), recurrent weights stay per-direction.
    def reord(m):
        return jnp.concatenate([m[0:H], m[H:2 * H], m[3 * H:4 * H], m[2 * H:3 * H]],
                               axis=0)

    wih_cat = jnp.concatenate([reord(wih_f).T, reord(wih_b).T], axis=1)     # (64, 8H)
    bias_cat = jnp.concatenate([reord(bih_f + bhh_f),
                                reord(bih_b + bhh_b)]).reshape(1, -1)       # (1, 8H)

    bf16 = jnp.bfloat16
    return dict(
        w1=w1.astype(bf16), s1=s1, w2=w2.astype(bf16), s2=s2,
        wih=wih_cat.astype(bf16),
        whh_f=reord(whh_f).T.astype(bf16),                                  # (H, 4H)
        whh_b=reord(whh_b).T.astype(bf16),                                  # (H, 4H)
        bias=bias_cat,
        w_fc1=fc1_w.T.astype(bf16), b_fc1=fc1_b.reshape(1, -1),
        w_fc2=fc2_w.T.astype(bf16), b_fc2=fc2_b.reshape(1, -1),
    )


if __name__ == "__main__":
    key = jax.random.PRNGKey(0)
    pkey, xkey = jax.random.split(key)

    B, INPUT_DIM, L = 2, 4, 16
    HIDDEN_DIM, NUM_CLASSES = 32, 3

    params = init_params(pkey, INPUT_DIM, HIDDEN_DIM, NUM_CLASSES)
    x = jax.random.normal(xkey, (B, INPUT_DIM, L), jnp.float32)   # NCL, like PyTorch

    fwd = jax.jit(functools.partial(cnn_lstm_attention_forward, params=params))
    logits, attn_weights = fwd(x)
    jax.block_until_ready((logits, attn_weights))

    assert logits.shape == (B, NUM_CLASSES)
    assert attn_weights.shape == (B, L // 4, 1)
    assert bool(jnp.all(jnp.isfinite(logits)))
    print("KERNEL_OK")
</pallas_src>

<mosaic_0001>
module attributes {stable_mosaic.version = 11 : i64} {
  func.func @_fused_forward_kernel(%arg0: i32, %arg1: memref<2x16x4xf32, #tpu.memory_space<vmem>>, %arg2: memref<12x32xbf16, #tpu.memory_space<vmem>>, %arg3: memref<1x32xf32, #tpu.memory_space<vmem>>, %arg4: memref<96x64xbf16, #tpu.memory_space<vmem>>, %arg5: memref<1x64xf32, #tpu.memory_space<vmem>>, %arg6: memref<64x128xbf16, #tpu.memory_space<vmem>>, %arg7: memref<16x64xbf16, #tpu.memory_space<vmem>>, %arg8: memref<16x64xbf16, #tpu.memory_space<vmem>>, %arg9: memref<1x128xf32, #tpu.memory_space<vmem>>, %arg10: memref<32x16xbf16, #tpu.memory_space<vmem>>, %arg11: memref<1x16xf32, #tpu.memory_space<vmem>>, %arg12: memref<16x3xbf16, #tpu.memory_space<vmem>>, %arg13: memref<1x3xf32, #tpu.memory_space<vmem>>, %arg14: memref<2x3xf32, #tpu.memory_space<vmem>>) attributes {dimension_semantics = [#tpu.dimension_semantics<parallel>], iteration_bounds = array<i64: 1>, scalar_prefetch = 0 : i64, scratch_operands = 0 : i64, tpu.core_type = #tpu.core_type<tc>, window_params = [{transform_indices = @transform_0, window_bounds = array<i64: 2, 16, 4>}, {pipeline_mode = #tpu.pipeline_mode<synchronous>, transform_indices = @transform_1, window_bounds = array<i64: 12, 32>}, {pipeline_mode = #tpu.pipeline_mode<synchronous>, transform_indices = @transform_2, window_bounds = array<i64: 1, 32>}, {pipeline_mode = #tpu.pipeline_mode<synchronous>, transform_indices = @transform_3, window_bounds = array<i64: 96, 64>}, {pipeline_mode = #tpu.pipeline_mode<synchronous>, transform_indices = @transform_4, window_bounds = array<i64: 1, 64>}, {pipeline_mode = #tpu.pipeline_mode<synchronous>, transform_indices = @transform_5, window_bounds = array<i64: 64, 128>}, {pipeline_mode = #tpu.pipeline_mode<synchronous>, transform_indices = @transform_6, window_bounds = array<i64: 16, 64>}, {pipeline_mode = #tpu.pipeline_mode<synchronous>, transform_indices = @transform_7, window_bounds = array<i64: 16, 64>}, {pipeline_mode = #tpu.pipeline_mode<synchronous>, transform_indices = @transform_8, window_bounds = array<i64: 1, 128>}, {pipeline_mode = #tpu.pipeline_mode<synchronous>, transform_indices = @transform_9, window_bounds = array<i64: 32, 16>}, {pipeline_mode = #tpu.pipeline_mode<synchronous>, transform_indices = @transform_10, window_bounds = array<i64: 1, 16>}, {pipeline_mode = #tpu.pipeline_mode<synchronous>, transform_indices = @transform_11, window_bounds = array<i64: 16, 3>}, {pipeline_mode = #tpu.pipeline_mode<synchronous>, transform_indices = @transform_12, window_bounds = array<i64: 1, 3>}, {transform_indices = @transform_13, window_bounds = array<i64: 2, 3>}]} {
    %c0 = arith.constant 0 : index
    %c0_0 = arith.constant 0 : index
    %c0_1 = arith.constant 0 : index
    %0 = vector.load %arg1[%c0, %c0_0, %c0_1] : memref<2x16x4xf32, #tpu.memory_space<vmem>>, vector<2x16x4xf32>
    %c0_2 = arith.constant 0 : index
    %c0_3 = arith.constant 0 : index
    %1 = vector.load %arg3[%c0_2, %c0_3] : memref<1x32xf32, #tpu.memory_space<vmem>>, vector<1x32xf32>
    %2 = arith.truncf %0 : vector<2x16x4xf32> to vector<2x16x4xbf16>
    %cst = arith.constant 0.000000e+00 : bf16
    %3 = vector.broadcast %cst : bf16 to vector<2x1x4xbf16>
    %4 = tpu.concatenate %3, %2, %3 in 1 : vector<2x1x4xbf16>, vector<2x16x4xbf16>, vector<2x1x4xbf16> -> vector<2x18x4xbf16>
    %5 = vector.extract_strided_slice %4 {offsets = [0, 0, 0], sizes = [2, 16, 4], strides = [1, 1, 1]} : vector<2x18x4xbf16> to vector<2x16x4xbf16>
    %6 = vector.extract_strided_slice %4 {offsets = [0, 1, 0], sizes = [2, 16, 4], strides = [1, 1, 1]} : vector<2x18x4xbf16> to vector<2x16x4xbf16>
    %7 = vector.extract_strided_slice %4 {offsets = [0, 2, 0], sizes = [2, 16, 4], strides = [1, 1, 1]} : vector<2x18x4xbf16> to vector<2x16x4xbf16>
    %8 = tpu.concatenate %5, %6, %7 in 2 : vector<2x16x4xbf16>, vector<2x16x4xbf16>, vector<2x16x4xbf16> -> vector<2x16x12xbf16>
    %9 = vector.shape_cast %8 : vector<2x16x12xbf16> to vector<32x12xbf16>
    %c0_4 = arith.constant 0 : index
    %c0_5 = arith.constant 0 : index
    %10 = vector.load %arg2[%c0_4, %c0_5] : memref<12x32xbf16, #tpu.memory_space<vmem>>, vector<12x32xbf16>
    %cst_6 = arith.constant dense<0.000000e+00> : vector<32x32xf32>
    %11 = tpu.matmul %9, %10, %cst_6 {dimension_numbers = #tpu.dot_dimension_numbers<[1], [0], [0], [1], [0, 0, 1, 1], [], []>} : vector<32x12xbf16>, vector<12x32xbf16>, vector<32x32xf32> -> vector<32x32xf32>
    %12 = vector.broadcast %1 : vector<1x32xf32> to vector<32x32xf32>
    %13 = arith.addf %11, %12 : vector<32x32xf32>
    %cst_7 = arith.constant 0.000000e+00 : f32
    %14 = vector.broadcast %cst_7 : f32 to vector<32x32xf32>
    %15 = arith.maximumf %13, %14 : vector<32x32xf32>
    %16 = vector.shape_cast %15 : vector<32x32xf32> to vector<16x2x32xf32>
    %cst_8 = arith.constant dense<0xFF800000> : vector<16x32xf32>
    %17 = vector.multi_reduction <maximumf>, %16, %cst_8 [1] : vector<16x2x32xf32> to vector<16x32xf32>
    %18 = vector.shape_cast %17 : vector<16x32xf32> to vector<2x8x32xf32>
    %c0_9 = arith.constant 0 : index
    %c0_10 = arith.constant 0 : index
    %19 = vector.load %arg5[%c0_9, %c0_10] : memref<1x64xf32, #tpu.memory_space<vmem>>, vector<1x64xf32>
    %20 = arith.truncf %18 : vector<2x8x32xf32> to vector<2x8x32xbf16>
    %cst_11 = arith.constant 0.000000e+00 : bf16
    %21 = vector.broadcast %cst_11 : bf16 to vector<2x1x32xbf16>
    %22 = tpu.concatenate %21, %20, %21 in 1 : vector<2x1x32xbf16>, vector<2x8x32xbf16>, vector<2x1x32xbf16> -> vector<2x10x32xbf16>
    %23 = vector.extract_strided_slice %22 {offsets = [0, 0, 0], sizes = [2, 8, 32], strides = [1, 1, 1]} : vector<2x10x32xbf16> to vector<2x8x32xbf16>
    %24 = vector.extract_strided_slice %22 {offsets = [0, 1, 0], sizes = [2, 8, 32], strides = [1, 1, 1]} : vector<2x10x32xbf16> to vector<2x8x32xbf16>
    %25 = vector.extract_strided_slice %22 {offsets = [0, 2, 0], sizes = [2, 8, 32], strides = [1, 1, 1]} : vector<2x10x32xbf16> to vector<2x8x32xbf16>
    %26 = tpu.concatenate %23, %24, %25 in 2 : vector<2x8x32xbf16>, vector<2x8x32xbf16>, vector<2x8x32xbf16> -> vector<2x8x96xbf16>
    %27 = vector.shape_cast %26 : vector<2x8x96xbf16> to vector<16x96xbf16>
    %c0_12 = arith.constant 0 : index
    %c0_13 = arith.constant 0 : index
    %28 = vector.load %arg4[%c0_12, %c0_13] : memref<96x64xbf16, #tpu.memory_space<vmem>>, vector<96x64xbf16>
    %cst_14 = arith.constant dense<0.000000e+00> : vector<16x64xf32>
    %29 = tpu.matmul %27, %28, %cst_14 {dimension_numbers = #tpu.dot_dimension_numbers<[1], [0], [0], [1], [0, 0, 1, 1], [], []>} : vector<16x96xbf16>, vector<96x64xbf16>, vector<16x64xf32> -> vector<16x64xf32>
    %30 = vector.broadcast %19 : vector<1x64xf32> to vector<16x64xf32>
    %31 = arith.addf %29, %30 : vector<16x64xf32>
    %cst_15 = arith.constant 0.000000e+00 : f32
    %32 = vector.broadcast %cst_15 : f32 to vector<16x64xf32>
    %33 = arith.maximumf %31, %32 : vector<16x64xf32>
    %34 = vector.shape_cast %33 : vector<16x64xf32> to vector<8x2x64xf32>
    %cst_16 = arith.constant dense<0xFF800000> : vector<8x64xf32>
    %35 = vector.multi_reduction <maximumf>, %34, %cst_16 [1] : vector<8x2x64xf32> to vector<8x64xf32>
    %36 = vector.shape_cast %35 : vector<8x64xf32> to vector<2x4x64xf32>
    %37 = vector.shape_cast %36 : vector<2x4x64xf32> to vector<8x64xf32>
    %38 = arith.truncf %37 : vector<8x64xf32> to vector<8x64xbf16>
    %c0_17 = arith.constant 0 : index
    %c0_18 = arith.constant 0 : index
    %39 = vector.load %arg6[%c0_17, %c0_18] : memref<64x128xbf16, #tpu.memory_space<vmem>>, vector<64x128xbf16>
    %cst_19 = arith.constant dense<0.000000e+00> : vector<8x128xf32>
    %40 = tpu.matmul %38, %39, %cst_19 {dimension_numbers = #tpu.dot_dimension_numbers<[1], [0], [0], [1], [0, 0, 1, 1], [], []>} : vector<8x64xbf16>, vector<64x128xbf16>, vector<8x128xf32> -> vector<8x128xf32>
    %c0_20 = arith.constant 0 : index
    %c0_21 = arith.constant 0 : index
    %41 = vector.load %arg9[%c0_20, %c0_21] : memref<1x128xf32, #tpu.memory_space<vmem>>, vector<1x128xf32>
    %42 = vector.broadcast %41 : vector<1x128xf32> to vector<8x128xf32>
    %43 = arith.addf %40, %42 : vector<8x128xf32>
    %44 = vector.shape_cast %43 : vector<8x128xf32> to vector<2x4x128xf32>
    %45 = vector.extract_strided_slice %44 {offsets = [0, 0, 0], sizes = [2, 1, 64], strides = [1, 1, 1]} : vector<2x4x128xf32> to vector<2x1x64xf32>
    %46 = vector.shape_cast %45 : vector<2x1x64xf32> to vector<2x64xf32>
    %47 = vector.extract_strided_slice %44 {offsets = [0, 1, 0], sizes = [2, 1, 64], strides = [1, 1, 1]} : vector<2x4x128xf32> to vector<2x1x64xf32>
    %48 = vector.shape_cast %47 : vector<2x1x64xf32> to vector<2x64xf32>
    %49 = vector.extract_strided_slice %44 {offsets = [0, 2, 0], sizes = [2, 1, 64], strides = [1, 1, 1]} : vector<2x4x128xf32> to vector<2x1x64xf32>
    %50 = vector.shape_cast %49 : vector<2x1x64xf32> to vector<2x64xf32>
    %51 = vector.extract_strided_slice %44 {offsets = [0, 3, 0], sizes = [2, 1, 64], strides = [1, 1, 1]} : vector<2x4x128xf32> to vector<2x1x64xf32>
    %52 = vector.shape_cast %51 : vector<2x1x64xf32> to vector<2x64xf32>
    %53 = vector.extract_strided_slice %44 {offsets = [0, 3, 64], sizes = [2, 1, 64], strides = [1, 1, 1]} : vector<2x4x128xf32> to vector<2x1x64xf32>
    %54 = vector.shape_cast %53 : vector<2x1x64xf32> to vector<2x64xf32>
    %55 = vector.extract_strided_slice %44 {offsets = [0, 2, 64], sizes = [2, 1, 64], strides = [1, 1, 1]} : vector<2x4x128xf32> to vector<2x1x64xf32>
    %56 = vector.shape_cast %55 : vector<2x1x64xf32> to vector<2x64xf32>
    %57 = vector.extract_strided_slice %44 {offsets = [0, 1, 64], sizes = [2, 1, 64], strides = [1, 1, 1]} : vector<2x4x128xf32> to vector<2x1x64xf32>
    %58 = vector.shape_cast %57 : vector<2x1x64xf32> to vector<2x64xf32>
    %59 = vector.extract_strided_slice %44 {offsets = [0, 0, 64], sizes = [2, 1, 64], strides = [1, 1, 1]} : vector<2x4x128xf32> to vector<2x1x64xf32>
    %60 = vector.shape_cast %59 : vector<2x1x64xf32> to vector<2x64xf32>
    %c0_22 = arith.constant 0 : index
    %c0_23 = arith.constant 0 : index
    %61 = vector.load %arg7[%c0_22, %c0_23] : memref<16x64xbf16, #tpu.memory_space<vmem>>, vector<16x64xbf16>
    %c0_24 = arith.constant 0 : index
    %c0_25 = arith.constant 0 : index
    %62 = vector.load %arg8[%c0_24, %c0_25] : memref<16x64xbf16, #tpu.memory_space<vmem>>, vector<16x64xbf16>
    %cst_26 = arith.constant 0.000000e+00 : f32
    %63 = vector.broadcast %cst_26 : f32 to vector<2x16xf32>
    %cst_27 = arith.constant 0.000000e+00 : f32
    %64 = vector.broadcast %cst_27 : f32 to vector<2x16xf32>
    %cst_28 = arith.constant 0.000000e+00 : f32
    %65 = vector.broadcast %cst_28 : f32 to vector<2x16xf32>
    %cst_29 = arith.constant 0.000000e+00 : f32
    %66 = vector.broadcast %cst_29 : f32 to vector<2x16xf32>
    %cst_30 = arith.constant 0.000000e+00 : f32
    %67 = vector.broadcast %cst_30 : f32 to vector<2x16xf32>
    %cst_31 = arith.constant 0.000000e+00 : f32
    %68 = vector.broadcast %cst_31 : f32 to vector<2x16xf32>
    %69 = arith.truncf %63 : vector<2x16xf32> to vector<2x16xbf16>
    %cst_32 = arith.constant dense<0.000000e+00> : vector<2x64xf32>
    %70 = tpu.matmul %69, %61, %cst_32 {dimension_numbers = #tpu.dot_dimension_numbers<[1], [0], [0], [1], [0, 0, 1, 1], [], []>} : vector<2x16xbf16>, vector<16x64xbf16>, vector<2x64xf32> -> vector<2x64xf32>
    %71 = arith.addf %46, %70 : vector<2x64xf32>
    %72 = arith.truncf %65 : vector<2x16xf32> to vector<2x16xbf16>
    %cst_33 = arith.constant dense<0.000000e+00> : vector<2x64xf32>
    %73 = tpu.matmul %72, %62, %cst_33 {dimension_numbers = #tpu.dot_dimension_numbers<[1], [0], [0], [1], [0, 0, 1, 1], [], []>} : vector<2x16xbf16>, vector<16x64xbf16>, vector<2x64xf32> -> vector<2x64xf32>
    %74 = arith.addf %54, %73 : vector<2x64xf32>
    %75 = vector.extract_strided_slice %71 {offsets = [0, 0], sizes = [2, 48], strides = [1, 1]} : vector<2x64xf32> to vector<2x48xf32>
    %76 = arith.negf %75 : vector<2x48xf32>
    %77 = math.exp %76 : vector<2x48xf32>
    %cst_34 = arith.constant 1.000000e+00 : f32
    %78 = vector.broadcast %cst_34 : f32 to vector<2x48xf32>
    %79 = arith.addf %78, %77 : vector<2x48xf32>
    %80 = arith.divf %78, %79 : vector<2x48xf32>
    %81 = vector.extract_strided_slice %74 {offsets = [0, 0], sizes = [2, 48], strides = [1, 1]} : vector<2x64xf32> to vector<2x48xf32>
    %82 = arith.negf %81 : vector<2x48xf32>
    %83 = math.exp %82 : vector<2x48xf32>
    %cst_35 = arith.constant 1.000000e+00 : f32
    %84 = vector.broadcast %cst_35 : f32 to vector<2x48xf32>
    %85 = arith.addf %84, %83 : vector<2x48xf32>
    %86 = arith.divf %84, %85 : vector<2x48xf32>
    %87 = vector.extract_strided_slice %71 {offsets = [0, 48], sizes = [2, 16], strides = [1, 1]} : vector<2x64xf32> to vector<2x16xf32>
    %88 = math.tanh %87 : vector<2x16xf32>
    %89 = vector.extract_strided_slice %74 {offsets = [0, 48], sizes = [2, 16], strides = [1, 1]} : vector<2x64xf32> to vector<2x16xf32>
    %90 = math.tanh %89 : vector<2x16xf32>
    %91 = vector.extract_strided_slice %80 {offsets = [0, 16], sizes = [2, 16], strides = [1, 1]} : vector<2x48xf32> to vector<2x16xf32>
    %92 = arith.mulf %91, %64 : vector<2x16xf32>
    %93 = vector.extract_strided_slice %80 {offsets = [0, 0], sizes = [2, 16], strides = [1, 1]} : vector<2x48xf32> to vector<2x16xf32>
    %94 = arith.mulf %93, %88 : vector<2x16xf32>
    %95 = arith.addf %92, %94 : vector<2x16xf32>
    %96 = vector.extract_strided_slice %86 {offsets = [0, 16], sizes = [2, 16], strides = [1, 1]} : vector<2x48xf32> to vector<2x16xf32>
    %97 = arith.mulf %96, %66 : vector<2x16xf32>
    %98 = vector.extract_strided_slice %86 {offsets = [0, 0], sizes = [2, 16], strides = [1, 1]} : vector<2x48xf32> to vector<2x16xf32>
    %99 = arith.mulf %98, %90 : vector<2x16xf32>
    %100 = arith.addf %97, %99 : vector<2x16xf32>
    %101 = vector.extract_strided_slice %80 {offsets = [0, 32], sizes = [2, 16], strides = [1, 1]} : vector<2x48xf32> to vector<2x16xf32>
    %102 = math.tanh %95 : vector<2x16xf32>
    %103 = arith.mulf %101, %102 : vector<2x16xf32>
    %104 = vector.extract_strided_slice %86 {offsets = [0, 32], sizes = [2, 16], strides = [1, 1]} : vector<2x48xf32> to vector<2x16xf32>
    %105 = math.tanh %100 : vector<2x16xf32>
    %106 = arith.mulf %104, %105 : vector<2x16xf32>
    %107 = arith.addf %67, %103 : vector<2x16xf32>
    %108 = arith.addf %68, %106 : vector<2x16xf32>
    %109 = arith.truncf %103 : vector<2x16xf32> to vector<2x16xbf16>
    %cst_36 = arith.constant dense<0.000000e+00> : vector<2x64xf32>
    %110 = tpu.matmul %109, %61, %cst_36 {dimension_numbers = #tpu.dot_dimension_numbers<[1], [0], [0], [1], [0, 0, 1, 1], [], []>} : vector<2x16xbf16>, vector<16x64xbf16>, vector<2x64xf32> -> vector<2x64xf32>
    %111 = arith.addf %48, %110 : vector<2x64xf32>
    %112 = arith.truncf %106 : vector<2x16xf32> to vector<2x16xbf16>
    %cst_37 = arith.constant dense<0.000000e+00> : vector<2x64xf32>
    %113 = tpu.matmul %112, %62, %cst_37 {dimension_numbers = #tpu.dot_dimension_numbers<[1], [0], [0], [1], [0, 0, 1, 1], [], []>} : vector<2x16xbf16>, vector<16x64xbf16>, vector<2x64xf32> -> vector<2x64xf32>
    %114 = arith.addf %56, %113 : vector<2x64xf32>
    %115 = vector.extract_strided_slice %111 {offsets = [0, 0], sizes = [2, 48], strides = [1, 1]} : vector<2x64xf32> to vector<2x48xf32>
    %116 = arith.negf %115 : vector<2x48xf32>
    %117 = math.exp %116 : vector<2x48xf32>
    %cst_38 = arith.constant 1.000000e+00 : f32
    %118 = vector.broadcast %cst_38 : f32 to vector<2x48xf32>
    %119 = arith.addf %118, %117 : vector<2x48xf32>
    %120 = arith.divf %118, %119 : vector<2x48xf32>
    %121 = vector.extract_strided_slice %114 {offsets = [0, 0], sizes = [2, 48], strides = [1, 1]} : vector<2x64xf32> to vector<2x48xf32>
    %122 = arith.negf %121 : vector<2x48xf32>
    %123 = math.exp %122 : vector<2x48xf32>
    %cst_39 = arith.constant 1.000000e+00 : f32
    %124 = vector.broadcast %cst_39 : f32 to vector<2x48xf32>
    %125 = arith.addf %124, %123 : vector<2x48xf32>
    %126 = arith.divf %124, %125 : vector<2x48xf32>
    %127 = vector.extract_strided_slice %111 {offsets = [0, 48], sizes = [2, 16], strides = [1, 1]} : vector<2x64xf32> to vector<2x16xf32>
    %128 = math.tanh %127 : vector<2x16xf32>
    %129 = vector.extract_strided_slice %114 {offsets = [0, 48], sizes = [2, 16], strides = [1, 1]} : vector<2x64xf32> to vector<2x16xf32>
    %130 = math.tanh %129 : vector<2x16xf32>
    %131 = vector.extract_strided_slice %120 {offsets = [0, 16], sizes = [2, 16], strides = [1, 1]} : vector<2x48xf32> to vector<2x16xf32>
    %132 = arith.mulf %131, %95 : vector<2x16xf32>
    %133 = vector.extract_strided_slice %120 {offsets = [0, 0], sizes = [2, 16], strides = [1, 1]} : vector<2x48xf32> to vector<2x16xf32>
    %134 = arith.mulf %133, %128 : vector<2x16xf32>
    %135 = arith.addf %132, %134 : vector<2x16xf32>
    %136 = vector.extract_strided_slice %126 {offsets = [0, 16], sizes = [2, 16], strides = [1, 1]} : vector<2x48xf32> to vector<2x16xf32>
    %137 = arith.mulf %136, %100 : vector<2x16xf32>
    %138 = vector.extract_strided_slice %126 {offsets = [0, 0], sizes = [2, 16], strides = [1, 1]} : vector<2x48xf32> to vector<2x16xf32>
    %139 = arith.mulf %138, %130 : vector<2x16xf32>
    %140 = arith.addf %137, %139 : vector<2x16xf32>
    %141 = vector.extract_strided_slice %120 {offsets = [0, 32], sizes = [2, 16], strides = [1, 1]} : vector<2x48xf32> to vector<2x16xf32>
    %142 = math.tanh %135 : vector<2x16xf32>
    %143 = arith.mulf %141, %142 : vector<2x16xf32>
    %144 = vector.extract_strided_slice %126 {offsets = [0, 32], sizes = [2, 16], strides = [1, 1]} : vector<2x48xf32> to vector<2x16xf32>
    %145 = math.tanh %140 : vector<2x16xf32>
    %146 = arith.mulf %144, %145 : vector<2x16xf32>
    %147 = arith.addf %107, %143 : vector<2x16xf32>
    %148 = arith.addf %108, %146 : vector<2x16xf32>
    %149 = arith.truncf %143 : vector<2x16xf32> to vector<2x16xbf16>
    %cst_40 = arith.constant dense<0.000000e+00> : vector<2x64xf32>
    %150 = tpu.matmul %149, %61, %cst_40 {dimension_numbers = #tpu.dot_dimension_numbers<[1], [0], [0], [1], [0, 0, 1, 1], [], []>} : vector<2x16xbf16>, vector<16x64xbf16>, vector<2x64xf32> -> vector<2x64xf32>
    %151 = arith.addf %50, %150 : vector<2x64xf32>
    %152 = arith.truncf %146 : vector<2x16xf32> to vector<2x16xbf16>
    %cst_41 = arith.constant dense<0.000000e+00> : vector<2x64xf32>
    %153 = tpu.matmul %152, %62, %cst_41 {dimension_numbers = #tpu.dot_dimension_numbers<[1], [0], [0], [1], [0, 0, 1, 1], [], []>} : vector<2x16xbf16>, vector<16x64xbf16>, vector<2x64xf32> -> vector<2x64xf32>
    %154 = arith.addf %58, %153 : vector<2x64xf32>
    %155 = vector.extract_strided_slice %151 {offsets = [0, 0], sizes = [2, 48], strides = [1, 1]} : vector<2x64xf32> to vector<2x48xf32>
    %156 = arith.negf %155 : vector<2x48xf32>
    %157 = math.exp %156 : vector<2x48xf32>
    %cst_42 = arith.constant 1.000000e+00 : f32
    %158 = vector.broadcast %cst_42 : f32 to vector<2x48xf32>
    %159 = arith.addf %158, %157 : vector<2x48xf32>
    %160 = arith.divf %158, %159 : vector<2x48xf32>
    %161 = vector.extract_strided_slice %154 {offsets = [0, 0], sizes = [2, 48], strides = [1, 1]} : vector<2x64xf32> to vector<2x48xf32>
    %162 = arith.negf %161 : vector<2x48xf32>
    %163 = math.exp %162 : vector<2x48xf32>
    %cst_43 = arith.constant 1.000000e+00 : f32
    %164 = vector.broadcast %cst_43 : f32 to vector<2x48xf32>
    %165 = arith.addf %164, %163 : vector<2x48xf32>
    %166 = arith.divf %164, %165 : vector<2x48xf32>
    %167 = vector.extract_strided_slice %151 {offsets = [0, 48], sizes = [2, 16], strides = [1, 1]} : vector<2x64xf32> to vector<2x16xf32>
    %168 = math.tanh %167 : vector<2x16xf32>
    %169 = vector.extract_strided_slice %154 {offsets = [0, 48], sizes = [2, 16], strides = [1, 1]} : vector<2x64xf32> to vector<2x16xf32>
    %170 = math.tanh %169 : vector<2x16xf32>
    %171 = vector.extract_strided_slice %160 {offsets = [0, 16], sizes = [2, 16], strides = [1, 1]} : vector<2x48xf32> to vector<2x16xf32>
    %172 = arith.mulf %171, %135 : vector<2x16xf32>
    %173 = vector.extract_strided_slice %160 {offsets = [0, 0], sizes = [2, 16], strides = [1, 1]} : vector<2x48xf32> to vector<2x16xf32>
    %174 = arith.mulf %173, %168 : vector<2x16xf32>
    %175 = arith.addf %172, %174 : vector<2x16xf32>
    %176 = vector.extract_strided_slice %166 {offsets = [0, 16], sizes = [2, 16], strides = [1, 1]} : vector<2x48xf32> to vector<2x16xf32>
    %177 = arith.mulf %176, %140 : vector<2x16xf32>
    %178 = vector.extract_strided_slice %166 {offsets = [0, 0], sizes = [2, 16], strides = [1, 1]} : vector<2x48xf32> to vector<2x16xf32>
    %179 = arith.mulf %178, %170 : vector<2x16xf32>
    %180 = arith.addf %177, %179 : vector<2x16xf32>
    %181 = vector.extract_strided_slice %160 {offsets = [0, 32], sizes = [2, 16], strides = [1, 1]} : vector<2x48xf32> to vector<2x16xf32>
    %182 = math.tanh %175 : vector<2x16xf32>
    %183 = arith.mulf %181, %182 : vector<2x16xf32>
    %184 = vector.extract_strided_slice %166 {offsets = [0, 32], sizes = [2, 16], strides = [1, 1]} : vector<2x48xf32> to vector<2x16xf32>
    %185 = math.tanh %180 : vector<2x16xf32>
    %186 = arith.mulf %184, %185 : vector<2x16xf32>
    %187 = arith.addf %147, %183 : vector<2x16xf32>
    %188 = arith.addf %148, %186 : vector<2x16xf32>
    %189 = arith.truncf %183 : vector<2x16xf32> to vector<2x16xbf16>
    %cst_44 = arith.constant dense<0.000000e+00> : vector<2x64xf32>
    %190 = tpu.matmul %189, %61, %cst_44 {dimension_numbers = #tpu.dot_dimension_numbers<[1], [0], [0], [1], [0, 0, 1, 1], [], []>} : vector<2x16xbf16>, vector<16x64xbf16>, vector<2x64xf32> -> vector<2x64xf32>
    %191 = arith.addf %52, %190 : vector<2x64xf32>
    %192 = arith.truncf %186 : vector<2x16xf32> to vector<2x16xbf16>
    %cst_45 = arith.constant dense<0.000000e+00> : vector<2x64xf32>
    %193 = tpu.matmul %192, %62, %cst_45 {dimension_numbers = #tpu.dot_dimension_numbers<[1], [0], [0], [1], [0, 0, 1, 1], [], []>} : vector<2x16xbf16>, vector<16x64xbf16>, vector<2x64xf32> -> vector<2x64xf32>
    %194 = arith.addf %60, %193 : vector<2x64xf32>
    %195 = vector.extract_strided_slice %191 {offsets = [0, 0], sizes = [2, 48], strides = [1, 1]} : vector<2x64xf32> to vector<2x48xf32>
    %196 = arith.negf %195 : vector<2x48xf32>
    %197 = math.exp %196 : vector<2x48xf32>
    %cst_46 = arith.constant 1.000000e+00 : f32
    %198 = vector.broadcast %cst_46 : f32 to vector<2x48xf32>
    %199 = arith.addf %198, %197 : vector<2x48xf32>
    %200 = arith.divf %198, %199 : vector<2x48xf32>
    %201 = vector.extract_strided_slice %194 {offsets = [0, 0], sizes = [2, 48], strides = [1, 1]} : vector<2x64xf32> to vector<2x48xf32>
    %202 = arith.negf %201 : vector<2x48xf32>
    %203 = math.exp %202 : vector<2x48xf32>
    %cst_47 = arith.constant 1.000000e+00 : f32
    %204 = vector.broadcast %cst_47 : f32 to vector<2x48xf32>
    %205 = arith.addf %204, %203 : vector<2x48xf32>
    %206 = arith.divf %204, %205 : vector<2x48xf32>
    %207 = vector.extract_strided_slice %191 {offsets = [0, 48], sizes = [2, 16], strides = [1, 1]} : vector<2x64xf32> to vector<2x16xf32>
    %208 = math.tanh %207 : vector<2x16xf32>
    %209 = vector.extract_strided_slice %194 {offsets = [0, 48], sizes = [2, 16], strides = [1, 1]} : vector<2x64xf32> to vector<2x16xf32>
    %210 = math.tanh %209 : vector<2x16xf32>
    %211 = vector.extract_strided_slice %200 {offsets = [0, 16], sizes = [2, 16], strides = [1, 1]} : vector<2x48xf32> to vector<2x16xf32>
    %212 = arith.mulf %211, %175 : vector<2x16xf32>
    %213 = vector.extract_strided_slice %200 {offsets = [0, 0], sizes = [2, 16], strides = [1, 1]} : vector<2x48xf32> to vector<2x16xf32>
    %214 = arith.mulf %213, %208 : vector<2x16xf32>
    %215 = arith.addf %212, %214 : vector<2x16xf32>
    %216 = vector.extract_strided_slice %206 {offsets = [0, 16], sizes = [2, 16], strides = [1, 1]} : vector<2x48xf32> to vector<2x16xf32>
    %217 = arith.mulf %216, %180 : vector<2x16xf32>
    %218 = vector.extract_strided_slice %206 {offsets = [0, 0], sizes = [2, 16], strides = [1, 1]} : vector<2x48xf32> to vector<2x16xf32>
    %219 = arith.mulf %218, %210 : vector<2x16xf32>
    %220 = arith.addf %217, %219 : vector<2x16xf32>
    %221 = vector.extract_strided_slice %200 {offsets = [0, 32], sizes = [2, 16], strides = [1, 1]} : vector<2x48xf32> to vector<2x16xf32>
    %222 = math.tanh %215 : vector<2x16xf32>
    %223 = arith.mulf %221, %222 : vector<2x16xf32>
    %224 = vector.extract_strided_slice %206 {offsets = [0, 32], sizes = [2, 16], strides = [1, 1]} : vector<2x48xf32> to vector<2x16xf32>
    %225 = math.tanh %220 : vector<2x16xf32>
    %226 = arith.mulf %224, %225 : vector<2x16xf32>
    %227 = arith.addf %187, %223 : vector<2x16xf32>
    %228 = arith.addf %188, %226 : vector<2x16xf32>
    %229 = tpu.concatenate %227, %228 in 1 : vector<2x16xf32>, vector<2x16xf32> -> vector<2x32xf32>
    %230 = arith.truncf %229 : vector<2x32xf32> to vector<2x32xbf16>
    %c0_48 = arith.constant 0 : index
    %c0_49 = arith.constant 0 : index
    %231 = vector.load %arg10[%c0_48, %c0_49] : memref<32x16xbf16, #tpu.memory_space<vmem>>, vector<32x16xbf16>
    %cst_50 = arith.constant dense<0.000000e+00> : vector<2x16xf32>
    %232 = tpu.matmul %230, %231, %cst_50 {dimension_numbers = #tpu.dot_dimension_numbers<[1], [0], [0], [1], [0, 0, 1, 1], [], []>} : vector<2x32xbf16>, vector<32x16xbf16>, vector<2x16xf32> -> vector<2x16xf32>
    %c0_51 = arith.constant 0 : index
    %c0_52 = arith.constant 0 : index
    %233 = vector.load %arg11[%c0_51, %c0_52] : memref<1x16xf32, #tpu.memory_space<vmem>>, vector<1x16xf32>
    %234 = vector.broadcast %233 : vector<1x16xf32> to vector<2x16xf32>
    %235 = arith.addf %232, %234 : vector<2x16xf32>
    %cst_53 = arith.constant 0.000000e+00 : f32
    %236 = vector.broadcast %cst_53 : f32 to vector<2x16xf32>
    %237 = arith.maximumf %235, %236 : vector<2x16xf32>
    %238 = arith.truncf %237 : vector<2x16xf32> to vector<2x16xbf16>
    %c0_54 = arith.constant 0 : index
    %c0_55 = arith.constant 0 : index
    %239 = vector.load %arg12[%c0_54, %c0_55] : memref<16x3xbf16, #tpu.memory_space<vmem>>, vector<16x3xbf16>
    %cst_56 = arith.constant dense<0.000000e+00> : vector<2x3xf32>
    %240 = tpu.matmul %238, %239, %cst_56 {dimension_numbers = #tpu.dot_dimension_numbers<[1], [0], [0], [1], [0, 0, 1, 1], [], []>} : vector<2x16xbf16>, vector<16x3xbf16>, vector<2x3xf32> -> vector<2x3xf32>
    %c0_57 = arith.constant 0 : index
    %c0_58 = arith.constant 0 : index
    %241 = vector.load %arg13[%c0_57, %c0_58] : memref<1x3xf32, #tpu.memory_space<vmem>>, vector<1x3xf32>
    %242 = vector.broadcast %241 : vector<1x3xf32> to vector<2x3xf32>
    %243 = arith.addf %240, %242 : vector<2x3xf32>
    %c0_59 = arith.constant 0 : index
    %c0_60 = arith.constant 0 : index
    %244 = vector.load %arg14[%c0_59, %c0_60] : memref<2x3xf32, #tpu.memory_space<vmem>>, vector<2x3xf32>
    tpu.vector_store %arg14[%c0_59, %c0_60], %243 {strides = array<i32>} : memref<2x3xf32, #tpu.memory_space<vmem>>, vector<2x3xf32>,
    return
  }
  func.func @transform_0(%arg0: i32) -> (i32, i32, i32) {
    %c0_i32 = arith.constant 0 : i32
    %c0_i32_0 = arith.constant 0 : i32
    %c0_i32_1 = arith.constant 0 : i32
    return %arg0, %c0_i32, %c0_i32_0 : i32, i32, i32
  }
  func.func @transform_1(%arg0: i32) -> (i32, i32) {
    %c0_i32 = arith.constant 0 : i32
    %c0_i32_0 = arith.constant 0 : i32
    %c0_i32_1 = arith.constant 0 : i32
    return %c0_i32, %c0_i32_0 : i32, i32
  }
  func.func @transform_2(%arg0: i32) -> (i32, i32) {
    %c0_i32 = arith.constant 0 : i32
    %c0_i32_0 = arith.constant 0 : i32
    %c0_i32_1 = arith.constant 0 : i32
    return %c0_i32, %c0_i32_0 : i32, i32
  }
  func.func @transform_3(%arg0: i32) -> (i32, i32) {
    %c0_i32 = arith.constant 0 : i32
    %c0_i32_0 = arith.constant 0 : i32
    %c0_i32_1 = arith.constant 0 : i32
    return %c0_i32, %c0_i32_0 : i32, i32
  }
  func.func @transform_4(%arg0: i32) -> (i32, i32) {
    %c0_i32 = arith.constant 0 : i32
    %c0_i32_0 = arith.constant 0 : i32
    %c0_i32_1 = arith.constant 0 : i32
    return %c0_i32, %c0_i32_0 : i32, i32
  }
  func.func @transform_5(%arg0: i32) -> (i32, i32) {
    %c0_i32 = arith.constant 0 : i32
    %c0_i32_0 = arith.constant 0 : i32
    %c0_i32_1 = arith.constant 0 : i32
    return %c0_i32, %c0_i32_0 : i32, i32
  }
  func.func @transform_6(%arg0: i32) -> (i32, i32) {
    %c0_i32 = arith.constant 0 : i32
    %c0_i32_0 = arith.constant 0 : i32
    %c0_i32_1 = arith.constant 0 : i32
    return %c0_i32, %c0_i32_0 : i32, i32
  }
  func.func @transform_7(%arg0: i32) -> (i32, i32) {
    %c0_i32 = arith.constant 0 : i32
    %c0_i32_0 = arith.constant 0 : i32
    %c0_i32_1 = arith.constant 0 : i32
    return %c0_i32, %c0_i32_0 : i32, i32
  }
  func.func @transform_8(%arg0: i32) -> (i32, i32) {
    %c0_i32 = arith.constant 0 : i32
    %c0_i32_0 = arith.constant 0 : i32
    %c0_i32_1 = arith.constant 0 : i32
    return %c0_i32, %c0_i32_0 : i32, i32
  }
  func.func @transform_9(%arg0: i32) -> (i32, i32) {
    %c0_i32 = arith.constant 0 : i32
    %c0_i32_0 = arith.constant 0 : i32
    %c0_i32_1 = arith.constant 0 : i32
    return %c0_i32, %c0_i32_0 : i32, i32
  }
  func.func @transform_10(%arg0: i32) -> (i32, i32) {
    %c0_i32 = arith.constant 0 : i32
    %c0_i32_0 = arith.constant 0 : i32
    %c0_i32_1 = arith.constant 0 : i32
    return %c0_i32, %c0_i32_0 : i32, i32
  }
  func.func @transform_11(%arg0: i32) -> (i32, i32) {
    %c0_i32 = arith.constant 0 : i32
    %c0_i32_0 = arith.constant 0 : i32
    %c0_i32_1 = arith.constant 0 : i32
    return %c0_i32, %c0_i32_0 : i32, i32
  }
  func.func @transform_12(%arg0: i32) -> (i32, i32) {
    %c0_i32 = arith.constant 0 : i32
    %c0_i32_0 = arith.constant 0 : i32
    %c0_i32_1 = arith.constant 0 : i32
    return %c0_i32, %c0_i32_0 : i32, i32
  }
  func.func @transform_13(%arg0: i32) -> (i32, i32) {
    %c0_i32 = arith.constant 0 : i32
    %c0_i32_0 = arith.constant 0 : i32
    return %arg0, %c0_i32 : i32, i32
  }
}

</mosaic_0001>

<llo_original>
// kernel: cnn_lstm_attention_forward.1
$region0: #{cnn_lstm_attention_forward.1}
  #allocation0 [shape = 'u32[]', space=smem, size = 0x4, offset = 0x4, fixed_abs, tag = 'smem constant byte address 0x4 - core index']
  #allocation1 [shape = 'u32[72,128]{1,0:T(1,128)}', space=vmem, size = 0x9000, scoped, tag = 'internal scratch']
  %s0 = inlined_call_operand.vmem [shape: f32[2,16,4], index: 0, kind: input, shape index: {}]
  %s1 = inlined_call_operand.hbm [shape: bf16[12,32], index: 1, kind: input, shape index: {}]
  %s2 = inlined_call_operand.vmem [shape: f32[1,32], index: 2, kind: input, shape index: {}]
  %s3 = inlined_call_operand.vmem [shape: bf16[96,64], index: 3, kind: input, shape index: {}]
  %s4 = inlined_call_operand.vmem [shape: f32[1,64], index: 4, kind: input, shape index: {}]
  %s5 = inlined_call_operand.hbm [shape: bf16[64,128], index: 5, kind: input, shape index: {}]
  %s6 = inlined_call_operand.hbm [shape: bf16[16,64], index: 6, kind: input, shape index: {}]
  %s7 = inlined_call_operand.hbm [shape: bf16[16,64], index: 7, kind: input, shape index: {}]
  %s8 = inlined_call_operand.vmem [shape: f32[1,128], index: 8, kind: input, shape index: {}]
  %s9 = inlined_call_operand.hbm [shape: bf16[32,16], index: 9, kind: input, shape index: {}]
  %s10 = inlined_call_operand.hbm [shape: f32[1,16], index: 10, kind: input, shape index: {}]
  %s11 = inlined_call_operand.hbm [shape: bf16[16,3], index: 11, kind: input, shape index: {}]
  %s12 = inlined_call_operand.hbm [shape: f32[1,3], index: 12, kind: input, shape index: {}]
  %s13 = inlined_call_operand.hbm [shape: f32[2,3], index: 13, kind: output, shape index: {}]
  %s14 = sld [smem:[#allocation0]]
  $region94: #{cnn_lstm_attention_forward.1} parent=0
    _
  %s16 = ssub.s32 1, %s14
  %s17 = scalar_select 0, %s16, %s14
  $region1: #{cnn_lstm_attention_forward.1} parent=0
    #allocation2 [shape = 'u8[4096]{0}', space=vmem, size = 0x1000, scoped, tag = 'input window, operand 1, single buffered']
    #allocation3 [shape = 's32[1]{0}', space=sflag, size = 0x4, scoped, tag = 'scoped memory for cnn_lstm_attention_forward.1']
    #allocation4 [shape = 's32[1]{0}', space=sflag, size = 0x4, scoped, tag = 'scoped memory for cnn_lstm_attention_forward.1']
    #allocation5 [shape = 'u8[16384]{0}', space=vmem, size = 0x4000, scoped, tag = 'input window, operand 5, single buffered']
    #allocation6 [shape = 's32[1]{0}', space=sflag, size = 0x4, scoped, tag = 'scoped memory for cnn_lstm_attention_forward.1']
    #allocation7 [shape = 'u8[4096]{0}', space=vmem, size = 0x1000, scoped, tag = 'input window, operand 6, single buffered']
    #allocation8 [shape = 'u8[4096]{0}', space=vmem, size = 0x1000, scoped, tag = 'input window, operand 7, single buffered']
    #allocation9 [shape = 's32[1]{0}', space=sflag, size = 0x4, scoped, tag = 'scoped memory for cnn_lstm_attention_forward.1']
    #allocation10 [shape = 'u8[8192]{0}', space=vmem, size = 0x2000, scoped, tag = 'input window, operand 9, single buffered']
    #allocation11 [shape = 'u8[512]{0}', space=vmem, size = 0x400, scoped, tag = 'input window, operand 10, single buffered']
    #allocation12 [shape = 's32[1]{0}', space=sflag, size = 0x4, scoped, tag = 'scoped memory for cnn_lstm_attention_forward.1']
    #allocation13 [shape = 'u8[4096]{0}', space=vmem, size = 0x1000, scoped, tag = 'input window, operand 11, single buffered']
    #allocation14 [shape = 'u8[512]{0}', space=vmem, size = 0x400, scoped, tag = 'input window, operand 12, single buffered']
    #allocation15 [shape = 's32[1]{0}', space=sflag, size = 0x4, scoped, tag = 'scoped memory for cnn_lstm_attention_forward.1']
    #allocation16 [shape = 'u8[1024]{0}', space=vmem, size = 0x400, scoped, tag = 'output window, operand 0, single buffered']
    %18 = vsyncpa [#allocation3], 0
    %19 = vsyncpa [#allocation6], 0
    %20 = vsyncpa [#allocation9], 0
    %21 = vsyncpa [#allocation12], 0
    %22 = vsyncpa [#allocation15], 0
    %23 = vsyncpa [#allocation4], 0
    // Predicated region
    $region2: #{cnn_lstm_attention_forward.1} parent=1 // pred_check
      _
    $region3: #{cnn_lstm_attention_forward.1} parent=1 // pred_check_branch
      %25 = sbr.rel (0) target = $region5
    $region4: #{cnn_lstm_attention_forward.1} parent=1 // pred_region
      _
    $region5: #{cnn_lstm_attention_forward.1} parent=1 // pred_fallthru
      _
    // Predicated region
    $region6: #{cnn_lstm_attention_forward.1} parent=1 // pred_check
      _
    $region7: #{cnn_lstm_attention_forward.1} parent=1 // pred_check_branch
      %27 = sbr.rel (0) target = $region9
    $region8: #{cnn_lstm_attention_forward.1} parent=1 // pred_region
      %29 = vsyncadd [#allocation3], 0
      %s30 = sshll.u32 %s1, 4
      %s31 = int_to_ptr.hbm [resolvable:$true] %s30
      %s32 = sshll.u32 [#allocation2], 4
      %s33 = int_to_ptr.vmem [resolvable:$true] %s32
      %38 = dma.hbm_to_vmem [thread:$0]  %s31, 128, %s33, [#allocation3], 64, 64, 4
    $region9: #{cnn_lstm_attention_forward.1} parent=1 // pred_fallthru
      _
    // Predicated region
    $region10: #{cnn_lstm_attention_forward.1} parent=1 // pred_check
      _
    $region11: #{cnn_lstm_attention_forward.1} parent=1 // pred_check_branch
      %40 = sbr.rel (0) target = $region13
    $region12: #{cnn_lstm_attention_forward.1} parent=1 // pred_region
      _
    $region13: #{cnn_lstm_attention_forward.1} parent=1 // pred_fallthru
      _
    // Predicated region
    $region14: #{cnn_lstm_attention_forward.1} parent=1 // pred_check
      _
    $region15: #{cnn_lstm_attention_forward.1} parent=1 // pred_check_branch
      %42 = sbr.rel (0) target = $region17
    $region16: #{cnn_lstm_attention_forward.1} parent=1 // pred_region
      _
    $region17: #{cnn_lstm_attention_forward.1} parent=1 // pred_fallthru
      _
    // Predicated region
    $region18: #{cnn_lstm_attention_forward.1} parent=1 // pred_check
      _
    $region19: #{cnn_lstm_attention_forward.1} parent=1 // pred_check_branch
      %44 = sbr.rel (0) target = $region21
    $region20: #{cnn_lstm_attention_forward.1} parent=1 // pred_region
      _
    $region21: #{cnn_lstm_attention_forward.1} parent=1 // pred_fallthru
      _
    // Predicated region
    $region22: #{cnn_lstm_attention_forward.1} parent=1 // pred_check
      _
    $region23: #{cnn_lstm_attention_forward.1} parent=1 // pred_check_branch
      %46 = sbr.rel (0) target = $region25
    $region24: #{cnn_lstm_attention_forward.1} parent=1 // pred_region
      %48 = vsyncadd [#allocation6], 0
      %s49 = sshll.u32 %s5, 4
      %s50 = int_to_ptr.hbm [resolvable:$true] %s49
      %s51 = sshll.u32 [#allocation5], 4
      %s52 = int_to_ptr.vmem [resolvable:$true] %s51
      %57 = dma.hbm_to_vmem [thread:$0]  %s50, 512, %s52, [#allocation6], 64, 64, 4
    $region25: #{cnn_lstm_attention_forward.1} parent=1 // pred_fallthru
      _
    // Predicated region
    $region26: #{cnn_lstm_attention_forward.1} parent=1 // pred_check
      _
    $region27: #{cnn_lstm_attention_forward.1} parent=1 // pred_check_branch
      %59 = sbr.rel (0) target = $region29
    $region28: #{cnn_lstm_attention_forward.1} parent=1 // pred_region
      %61 = vsyncadd [#allocation6], 0
      %s62 = sshll.u32 %s6, 4
      %s63 = int_to_ptr.hbm [resolvable:$true] %s62
      %s64 = sshll.u32 [#allocation7], 4
      %s65 = int_to_ptr.vmem [resolvable:$true] %s64
      %70 = dma.hbm_to_vmem [thread:$0]  %s63, 128, %s65, [#allocation6], 64, 64, 4
    $region29: #{cnn_lstm_attention_forward.1} parent=1 // pred_fallthru
      _
    // Predicated region
    $region30: #{cnn_lstm_attention_forward.1} parent=1 // pred_check
      _
    $region31: #{cnn_lstm_attention_forward.1} parent=1 // pred_check_branch
      %72 = sbr.rel (0) target = $region33
    $region32: #{cnn_lstm_attention_forward.1} parent=1 // pred_region
      %74 = vsyncadd [#allocation9], 0
      %s75 = sshll.u32 %s7, 4
      %s76 = int_to_ptr.hbm [resolvable:$true] %s75
      %s77 = sshll.u32 [#allocation8], 4
      %s78 = int_to_ptr.vmem [resolvable:$true] %s77
      %83 = dma.hbm_to_vmem [thread:$0]  %s76, 128, %s78, [#allocation9], 64, 64, 4
    $region33: #{cnn_lstm_attention_forward.1} parent=1 // pred_fallthru
      _
    // Predicated region
    $region34: #{cnn_lstm_attention_forward.1} parent=1 // pred_check
      _
    $region35: #{cnn_lstm_attention_forward.1} parent=1 // pred_check_branch
      %85 = sbr.rel (0) target = $region37
    $region36: #{cnn_lstm_attention_forward.1} parent=1 // pred_region
      _
    $region37: #{cnn_lstm_attention_forward.1} parent=1 // pred_fallthru
      _
    // Predicated region
    $region38: #{cnn_lstm_attention_forward.1} parent=1 // pred_check
      _
    $region39: #{cnn_lstm_attention_forward.1} parent=1 // pred_check_branch
      %87 = sbr.rel (0) target = $region41
    $region40: #{cnn_lstm_attention_forward.1} parent=1 // pred_region
      %89 = vsyncadd [#allocation9], 0
      %s90 = sshll.u32 %s9, 4
      %s91 = int_to_ptr.hbm [resolvable:$true] %s90
      %s92 = sshll.u32 [#allocation10], 4
      %s93 = int_to_ptr.vmem [resolvable:$true] %s92
      %98 = dma.hbm_to_vmem [thread:$0]  %s91, 256, %s93, [#allocation9], 64, 64, 4
    $region41: #{cnn_lstm_attention_forward.1} parent=1 // pred_fallthru
      _
    // Predicated region
    $region42: #{cnn_lstm_attention_forward.1} parent=1 // pred_check
      _
    $region43: #{cnn_lstm_attention_forward.1} parent=1 // pred_check_branch
      %100 = sbr.rel (0) target = $region45
    $region44: #{cnn_lstm_attention_forward.1} parent=1 // pred_region
      %102 = vsyncadd [#allocation12], 0
      %s104 = sshll.u32 %s10, 4
      %s105 = int_to_ptr.hbm [resolvable:$true] %s104
      %s106 = sshll.u32 [#allocation11], 4
      %s107 = int_to_ptr.vmem [resolvable:$true] %s106
      %109 = dma.hbm_to_vmem [thread:$0]  %s105, 16, %s107, [#allocation12]
    $region45: #{cnn_lstm_attention_forward.1} parent=1 // pred_fallthru
      _
    // Predicated region
    $region46: #{cnn_lstm_attention_forward.1} parent=1 // pred_check
      _
    $region47: #{cnn_lstm_attention_forward.1} parent=1 // pred_check_branch
      %111 = sbr.rel (0) target = $region49
    $region48: #{cnn_lstm_attention_forward.1} parent=1 // pred_region
      %113 = vsyncadd [#allocation12], 0
      %s114 = sshll.u32 %s11, 4
      %s115 = int_to_ptr.hbm [resolvable:$true] %s114
      %s116 = sshll.u32 [#allocation13], 4
      %s117 = int_to_ptr.vmem [resolvable:$true] %s116
      %122 = dma.hbm_to_vmem [thread:$0]  %s115, 128, %s117, [#allocation12], 64, 64, 4
    $region49: #{cnn_lstm_attention_forward.1} parent=1 // pred_fallthru
      _
    // Predicated region
    $region50: #{cnn_lstm_attention_forward.1} parent=1 // pred_check
      _
    $region51: #{cnn_lstm_attention_forward.1} parent=1 // pred_check_branch
      %124 = sbr.rel (0) target = $region53
    $region52: #{cnn_lstm_attention_forward.1} parent=1 // pred_region
      %126 = vsyncadd [#allocation15], 0
      %s128 = sshll.u32 %s12, 4
      %s129 = int_to_ptr.hbm [resolvable:$true] %s128
      %s130 = sshll.u32 [#allocation14], 4
      %s131 = int_to_ptr.vmem [resolvable:$true] %s130
      %133 = dma.hbm_to_vmem [thread:$0]  %s129, 16, %s131, [#allocation15]
    $region53: #{cnn_lstm_attention_forward.1} parent=1 // pred_fallthru
      _
    // Predicated region
    $region54: #{cnn_lstm_attention_forward.1} parent=1 // pred_check
      _
    $region55: #{cnn_lstm_attention_forward.1} parent=1 // pred_check_branch
      %135 = sbr.rel (0) target = $region57
    $region56: #{cnn_lstm_attention_forward.1} parent=1 // pred_region
      %137 = dma.done [#allocation3], 128
    $region57: #{cnn_lstm_attention_forward.1} parent=1 // pred_fallthru
      _
    // Predicated region
    $region58: #{cnn_lstm_attention_forward.1} parent=1 // pred_check
      _
    $region59: #{cnn_lstm_attention_forward.1} parent=1 // pred_check_branch
      %139 = sbr.rel (0) target = $region61
    $region60: #{cnn_lstm_attention_forward.1} parent=1 // pred_region
      %141 = dma.done [#allocation6], 512
    $region61: #{cnn_lstm_attention_forward.1} parent=1 // pred_fallthru
      _
    // Predicated region
    $region62: #{cnn_lstm_attention_forward.1} parent=1 // pred_check
      _
    $region63: #{cnn_lstm_attention_forward.1} parent=1 // pred_check_branch
      %143 = sbr.rel (0) target = $region65
    $region64: #{cnn_lstm_attention_forward.1} parent=1 // pred_region
      %145 = dma.done [#allocation6], 128
    $region65: #{cnn_lstm_attention_forward.1} parent=1 // pred_fallthru
      _
    // Predicated region
    $region66: #{cnn_lstm_attention_forward.1} parent=1 // pred_check
      _
    $region67: #{cnn_lstm_attention_forward.1} parent=1 // pred_check_branch
      %147 = sbr.rel (0) target = $region69
    $region68: #{cnn_lstm_attention_forward.1} parent=1 // pred_region
      %149 = dma.done [#allocation9], 128
    $region69: #{cnn_lstm_attention_forward.1} parent=1 // pred_fallthru
      _
    // Predicated region
    $region70: #{cnn_lstm_attention_forward.1} parent=1 // pred_check
      _
    $region71: #{cnn_lstm_attention_forward.1} parent=1 // pred_check_branch
      %151 = sbr.rel (0) target = $region73
    $region72: #{cnn_lstm_attention_forward.1} parent=1 // pred_region
      %153 = dma.done [#allocation9], 256
    $region73: #{cnn_lstm_attention_forward.1} parent=1 // pred_fallthru
      _
    // Predicated region
    $region74: #{cnn_lstm_attention_forward.1} parent=1 // pred_check
      _
    $region75: #{cnn_lstm_attention_forward.1} parent=1 // pred_check_branch
      %155 = sbr.rel (0) target = $region77
    $region76: #{cnn_lstm_attention_forward.1} parent=1 // pred_region
      %157 = dma.done [#allocation12], 16
    $region77: #{cnn_lstm_attention_forward.1} parent=1 // pred_fallthru
      _
    // Predicated region
    $region78: #{cnn_lstm_attention_forward.1} parent=1 // pred_check
      _
    $region79: #{cnn_lstm_attention_forward.1} parent=1 // pred_check_branch
      %159 = sbr.rel (0) target = $region81
    $region80: #{cnn_lstm_attention_forward.1} parent=1 // pred_region
      %161 = dma.done [#allocation12], 128
    $region81: #{cnn_lstm_attention_forward.1} parent=1 // pred_fallthru
      _
    // Predicated region
    $region82: #{cnn_lstm_attention_forward.1} parent=1 // pred_check
      _
    $region83: #{cnn_lstm_attention_forward.1} parent=1 // pred_check_branch
      %163 = sbr.rel (0) target = $region85
    $region84: #{cnn_lstm_attention_forward.1} parent=1 // pred_region
      %165 = dma.done [#allocation15], 16
    $region85: #{cnn_lstm_attention_forward.1} parent=1 // pred_fallthru
      _
    %v167 = vld [vmem:[%s0] sm:$0xff]
    %v168 = vld [vmem:[%s0 + $0x8] sm:$0xff]
    %v169 = vld [vmem:[%s0 + $0x10] sm:$0xff]
    %v170 = vld [vmem:[%s0 + $0x18] sm:$0xff]
    %v171 = vld [vmem:[%s2] sm:$0x1]
    %v172 = vpack.c.bf16 %v167, %v167
    %v173 = vpack.c.bf16 %v168, %v168
    %v174 = vpack.c.bf16 %v169, %v169
    %v175 = vpack.c.bf16 %v170, %v170
    %v180 = vunpack.c.l.b16 %v172
    %v181 = vunpack.c.l.b16 %v173
    %v182 = vunpack.c.l.b16 %v174
    %v183 = vunpack.c.l.b16 %v175
    %v184 = vpack.c.b16 %v181, %v180
    %v185 = vpack.c.b16 %v183, %v182
    %v187 = vshrl.u32 %v184, 16
    %v189 = vrot.slane %v187, 7
    %v190 = vshll.u32 %v184, 16
    %v192 = vor.u32 %v189, %v190
    %v194 = vshrl.u32 %v185, 16
    %v196 = vrot.slane %v194, 7
    %v197 = vshll.u32 %v185, 16
    %v199 = vor.u32 %v196, %v197
    %vm204 = vcmask 1040384
    %vm205 = vsmask.f32 256
    %vm206 = vmand %vm204, %vm205
    %v207 = vsel %vm206, 0, %v192
    %v208 = vsel %vm206, 0, %v199
    %v209 = vsel %vm206, %v189, 0
    %v210 = vsel %vm206, %v196, 0
    %vm211 = vsmask.f32 7424
    %v213 = vshrl.u32 %v207, 16
    %v215 = vshll.u32 %v207, 16
    %v217 = vrot.slane %v215, 1
    %v218 = vor.u32 %v213, %v217
    %v220 = vshll.u32 %v209, 16
    %v222 = vrot.slane %v220, 1
    %v223 = vsel %vm211, %v218, %v222
    %v225 = vshrl.u32 %v208, 16
    %v227 = vshll.u32 %v208, 16
    %v229 = vrot.slane %v227, 1
    %v230 = vor.u32 %v225, %v229
    %v232 = vshll.u32 %v210, 16
    %v234 = vrot.slane %v232, 1
    %v235 = vsel %vm211, %v230, %v234
    %236 = vrot.lane.b32.xlu0 %v223, 4
    %v237 = vpop.permute.xlu0 %236
    %238 = vrot.lane.b32.xlu0 %v235, 4
    %v239 = vpop.permute.xlu0 %238
    %vm244 = vcmask 1046528
    %v245 = vrot.slane %v207, 1
    %v246 = vrot.slane %v209, 1
    %v247 = vsel %vm244, %v245, %v246
    %v248 = vrot.slane %v208, 1
    %v249 = vrot.slane %v210, 1
    %v250 = vsel %vm244, %v248, %v249
    %251 = vrot.lane.b32.xlu0 %v247, 8
    %v252 = vpop.permute.xlu0 %251
    %253 = vrot.lane.b32.xlu0 %v250, 8
    %v254 = vpop.permute.xlu0 %253
    %vm255 = vcmask 31744
    %v257 = vsel %vm255, %v207, %v237
    %v259 = vsel %vm255, %v208, %v239
    %vm260 = vcmask 64512
    %v262 = vsel %vm260, %v257, %v252
    %v264 = vsel %vm260, %v259, %v254
    %v265 = vld [vmem:[#allocation2] sm:$0xf]
    %v266 = vld [vmem:[#allocation2 + $0x4] sm:$0x3]
    %v268 = vperm.slane %v171, 0
    %v272 = vunpack.c.l.b16 %v265
    %v273 = vunpack.c.l.b16 %v266
    %v274 = vpack.c.b16 %v273, %v272
    %vm275 = vcmask 97280
    %v276 = vsel %vm275, %v262, 0
    %v278 = vsel %vm275, %v264, 0
    %vm280 = vcmask 1045504
    %v282 = vsel %vm280, %v274, 0
    %284 = vmatpush.bf16.msra.mxu0 0
    %285 = vmatpush.bf16.msra.mxu0 0
    %286 = vmatpush.bf16.msra.mxu0 0
    %287 = vmatpush.bf16.msra.mxu0 0
    %288 = vmatpush.bf16.msra.mxu0 0
    %289 = vmatpush.bf16.msra.mxu0 0
    %290 = vmatpush.bf16.msra.mxu0 0
    %291 = vmatpush.bf16.msra.mxu0 %v282
    %292 = vmatmul.bf16.gmra.mxu0 %v276
    %v293 = vpop.f32.mrf.mxu0
    %v294 = vadd.f32 %v268, %v293
    %v295 = vpop.f32.mrf.mxu0
    %v296 = vadd.f32 %v268, %v295
    %297 = vmatmul.bf16.gmra.mxu0 %v278
    %v298 = vpop.f32.mrf.mxu0
    %v299 = vadd.f32 %v268, %v298
    %v300 = vpop.f32.mrf.mxu0
    %v301 = vadd.f32 %v268, %v300
    %302 = vdwg.mxu0
    %v303 = vmax.f32 %v294, 0.0
    %v304 = vmax.f32 %v296, 0.0
    %v305 = vmax.f32 %v299, 0.0
    %v306 = vmax.f32 %v301, 0.0
    %v311 = vrot.slane %v303, 2
    %v312 = vrot.slane %v303, 4
    %v313 = vrot.slane %v303, 6
    %v314 = vrot.slane %v304, 2
    %v315 = vrot.slane %v304, 4
    %v316 = vrot.slane %v304, 6
    %v317 = vrot.slane %v305, 2
    %v318 = vrot.slane %v305, 4
    %v319 = vrot.slane %v305, 6
    %v320 = vrot.slane %v306, 2
    %v321 = vrot.slane %v306, 4
    %v322 = vrot.slane %v306, 6
    %vm335 = vcmask 254976
    %v336 = vsel %vm335, %v303, -inf
    %v337 = vrot.slane %v336, 4
    %v338 = vmax.f32 %v336, %v337
    %v339 = vrot.slane %v338, 2
    %v340 = vmax.f32 %v338, %v339
    %v341 = vrot.slane %v340, 1
    %v342 = vmax.f32 %v340, %v341
    %v343 = vsel %vm335, %v311, -inf
    %v344 = vrot.slane %v343, 4
    %v345 = vmax.f32 %v343, %v344
    %v346 = vrot.slane %v345, 2
    %v347 = vmax.f32 %v345, %v346
    %v348 = vrot.slane %v347, 1
    %v349 = vmax.f32 %v347, %v348
    %v350 = vsel %vm335, %v312, -inf
    %v351 = vrot.slane %v350, 4
    %v352 = vmax.f32 %v350, %v351
    %v353 = vrot.slane %v352, 2
    %v354 = vmax.f32 %v352, %v353
    %v355 = vrot.slane %v354, 1
    %v356 = vmax.f32 %v354, %v355
    %v357 = vsel %vm335, %v313, -inf
    %v358 = vrot.slane %v357, 4
    %v359 = vmax.f32 %v357, %v358
    %v360 = vrot.slane %v359, 2
    %v361 = vmax.f32 %v359, %v360
    %v362 = vrot.slane %v361, 1
    %v363 = vmax.f32 %v361, %v362
    %v364 = vsel %vm335, %v304, -inf
    %v365 = vrot.slane %v364, 4
    %v366 = vmax.f32 %v364, %v365
    %v367 = vrot.slane %v366, 2
    %v368 = vmax.f32 %v366, %v367
    %v369 = vrot.slane %v368, 1
    %v370 = vmax.f32 %v368, %v369
    %v371 = vsel %vm335, %v314, -inf
    %v372 = vrot.slane %v371, 4
    %v373 = vmax.f32 %v371, %v372
    %v374 = vrot.slane %v373, 2
    %v375 = vmax.f32 %v373, %v374
    %v376 = vrot.slane %v375, 1
    %v377 = vmax.f32 %v375, %v376
    %v378 = vsel %vm335, %v315, -inf
    %v379 = vrot.slane %v378, 4
    %v380 = vmax.f32 %v378, %v379
    %v381 = vrot.slane %v380, 2
    %v382 = vmax.f32 %v380, %v381
    %v383 = vrot.slane %v382, 1
    %v384 = vmax.f32 %v382, %v383
    %v385 = vsel %vm335, %v316, -inf
    %v386 = vrot.slane %v385, 4
    %v387 = vmax.f32 %v385, %v386
    %v388 = vrot.slane %v387, 2
    %v389 = vmax.f32 %v387, %v388
    %v390 = vrot.slane %v389, 1
    %v391 = vmax.f32 %v389, %v390
    %v392 = vsel %vm335, %v305, -inf
    %v393 = vrot.slane %v392, 4
    %v394 = vmax.f32 %v392, %v393
    %v395 = vrot.slane %v394, 2
    %v396 = vmax.f32 %v394, %v395
    %v397 = vrot.slane %v396, 1
    %v398 = vmax.f32 %v396, %v397
    %v399 = vsel %vm335, %v317, -inf
    %v400 = vrot.slane %v399, 4
    %v401 = vmax.f32 %v399, %v400
    %v402 = vrot.slane %v401, 2
    %v403 = vmax.f32 %v401, %v402
    %v404 = vrot.slane %v403, 1
    %v405 = vmax.f32 %v403, %v404
    %v406 = vsel %vm335, %v318, -inf
    %v407 = vrot.slane %v406, 4
    %v408 = vmax.f32 %v406, %v407
    %v409 = vrot.slane %v408, 2
    %v410 = vmax.f32 %v408, %v409
    %v411 = vrot.slane %v410, 1
    %v412 = vmax.f32 %v410, %v411
    %v413 = vsel %vm335, %v319, -inf
    %v414 = vrot.slane %v413, 4
    %v415 = vmax.f32 %v413, %v414
    %v416 = vrot.slane %v415, 2
    %v417 = vmax.f32 %v415, %v416
    %v418 = vrot.slane %v417, 1
    %v419 = vmax.f32 %v417, %v418
    %v420 = vsel %vm335, %v306, -inf
    %v421 = vrot.slane %v420, 4
    %v422 = vmax.f32 %v420, %v421
    %v423 = vrot.slane %v422, 2
    %v424 = vmax.f32 %v422, %v423
    %v425 = vrot.slane %v424, 1
    %v426 = vmax.f32 %v424, %v425
    %v427 = vsel %vm335, %v320, -inf
    %v428 = vrot.slane %v427, 4
    %v429 = vmax.f32 %v427, %v428
    %v430 = vrot.slane %v429, 2
    %v431 = vmax.f32 %v429, %v430
    %v432 = vrot.slane %v431, 1
    %v433 = vmax.f32 %v431, %v432
    %v434 = vsel %vm335, %v321, -inf
    %v435 = vrot.slane %v434, 4
    %v436 = vmax.f32 %v434, %v435
    %v437 = vrot.slane %v436, 2
    %v438 = vmax.f32 %v436, %v437
    %v439 = vrot.slane %v438, 1
    %v440 = vmax.f32 %v438, %v439
    %v441 = vsel %vm335, %v322, -inf
    %v442 = vrot.slane %v441, 4
    %v443 = vmax.f32 %v441, %v442
    %v444 = vrot.slane %v443, 2
    %v445 = vmax.f32 %v443, %v444
    %v446 = vrot.slane %v445, 1
    %v447 = vmax.f32 %v445, %v446
    %v448 = vld [vmem:[%s4] sm:$0x1]
    %v449 = vpack.c.bf16 %v342, %v342
    %v450 = vpack.c.bf16 %v349, %v349
    %v451 = vpack.c.bf16 %v356, %v356
    %v452 = vpack.c.bf16 %v363, %v363
    %v453 = vpack.c.bf16 %v370, %v370
    %v454 = vpack.c.bf16 %v377, %v377
    %v455 = vpack.c.bf16 %v384, %v384
    %v456 = vpack.c.bf16 %v391, %v391
    %v457 = vpack.c.bf16 %v398, %v398
    %v458 = vpack.c.bf16 %v405, %v405
    %v459 = vpack.c.bf16 %v412, %v412
    %v460 = vpack.c.bf16 %v419, %v419
    %v461 = vpack.c.bf16 %v426, %v426
    %v462 = vpack.c.bf16 %v433, %v433
    %v463 = vpack.c.bf16 %v440, %v440
    %v464 = vpack.c.bf16 %v447, %v447
    %v481 = vperm.slane %v449, 0
    %v482 = vperm.slane %v450, 0
    %v483 = vperm.slane %v451, 0
    %v484 = vperm.slane %v452, 0
    %v485 = vperm.slane %v453, 0
    %v486 = vperm.slane %v454, 0
    %v487 = vperm.slane %v455, 0
    %v488 = vperm.slane %v456, 0
    %v489 = vperm.slane %v457, 0
    %v490 = vperm.slane %v458, 0
    %v491 = vperm.slane %v459, 0
    %v492 = vperm.slane %v460, 0
    %v493 = vperm.slane %v461, 0
    %v494 = vperm.slane %v462, 0
    %v495 = vperm.slane %v463, 0
    %v496 = vperm.slane %v464, 0
    %v497 = vunpack.c.l.b16 %v481
    %v498 = vunpack.c.l.b16 %v482
    %v499 = vunpack.c.l.b16 %v483
    %v500 = vunpack.c.l.b16 %v484
    %v501 = vunpack.c.l.b16 %v485
    %v502 = vunpack.c.l.b16 %v486
    %v503 = vunpack.c.l.b16 %v487
    %v504 = vunpack.c.l.b16 %v488
    %v505 = vunpack.c.l.b16 %v489
    %v506 = vunpack.c.l.b16 %v490
    %v507 = vunpack.c.l.b16 %v491
    %v508 = vunpack.c.l.b16 %v492
    %v509 = vunpack.c.l.b16 %v493
    %v510 = vunpack.c.l.b16 %v494
    %v511 = vunpack.c.l.b16 %v495
    %v512 = vunpack.c.l.b16 %v496
    %vm513 = vcmask 1042434
    %v514 = vsel %vm513, %v498, %v497
    %vm515 = vcmask 1043459
    %v516 = vsel %vm515, %v499, %v514
    %vm517 = vcmask 1044484
    %v518 = vsel %vm517, %v500, %v516
    %vm519 = vcmask 1045509
    %v520 = vsel %vm519, %v501, %v518
    %vm521 = vcmask 1046534
    %v522 = vsel %vm521, %v502, %v520
    %vm523 = vcmask 1047559
    %v524 = vsel %vm523, %v503, %v522
    %v525 = vsel %vm513, %v506, %v505
    %v526 = vsel %vm515, %v507, %v525
    %v527 = vsel %vm517, %v508, %v526
    %v528 = vsel %vm519, %v509, %v527
    %v529 = vsel %vm521, %v510, %v528
    %v530 = vsel %vm523, %v511, %v529
    %v531 = vpack.c.b16 %v504, %v524
    %v532 = vpack.c.b16 %v512, %v530
    %v535 = vsel %vm206, 0, %v531
    %v536 = vsel %vm206, 0, %v532
    %vm537 = vcmask 1044480
    %vm538 = vsmask.f32 4352
    %vm539 = vmand %vm537, %vm538
    %v540 = vsel %vm539, %v535, 0
    %v541 = vsel %vm539, %v536, 0
    %v543 = vshrl.u32 %v540, 16
    %v545 = vshll.u32 %v540, 16
    %v547 = vrot.slane %v545, 1
    %v548 = vor.u32 %v543, %v547
    %v550 = vshrl.u32 %v541, 16
    %v552 = vshll.u32 %v541, 16
    %v554 = vrot.slane %v552, 1
    %v555 = vor.u32 %v550, %v554
    %556 = vrot.lane.b32.xlu0 %v548, 32
    %v557 = vpop.permute.xlu0 %556
    %558 = vrot.lane.b32.xlu0 %v555, 32
    %v559 = vpop.permute.xlu0 %558
    %v562 = vrot.slane %v540, 1
    %v563 = vrot.slane %v541, 1
    %564 = vrot.lane.b32.xlu0 %v562, 64
    %v565 = vpop.permute.xlu0 %564
    %566 = vrot.lane.b32.xlu0 %v563, 64
    %v567 = vpop.permute.xlu0 %566
    %vm568 = vcmask 261120
    %v570 = vsel %vm568, %v540, %v557
    %v572 = vsel %vm568, %v541, %v559
    %vm573 = vcmask 523264
    %v575 = vsel %vm573, %v570, %v565
    %v577 = vsel %vm573, %v572, %v567
    %v578 = vld [vmem:[%s3] sm:$0xf]
    %v579 = vld [vmem:[%s3 + $0x4] sm:$0xf]
    %v580 = vld [vmem:[%s3 + $0x8] sm:$0xf]
    %v581 = vld [vmem:[%s3 + $0xc] sm:$0xf]
    %v582 = vld [vmem:[%s3 + $0x10] sm:$0xf]
    %v583 = vld [vmem:[%s3 + $0x14] sm:$0xf]
    %v584 = vld [vmem:[%s3 + $0x18] sm:$0xf]
    %v585 = vld [vmem:[%s3 + $0x1c] sm:$0xf]
    %v586 = vld [vmem:[%s3 + $0x20] sm:$0xf]
    %v587 = vld [vmem:[%s3 + $0x24] sm:$0xf]
    %v588 = vld [vmem:[%s3 + $0x28] sm:$0xf]
    %v589 = vld [vmem:[%s3 + $0x2c] sm:$0xf]
    %v591 = vperm.slane %v448, 0
    %v595 = vunpack.c.l.b16 %v575
    %v596 = vunpack.c.l.b16 %v577
    %v597 = vpack.c.b16 %v596, %v595
    %v610 = vunpack.c.l.b16 %v578
    %v611 = vunpack.c.l.b16 %v579
    %v612 = vunpack.c.l.b16 %v580
    %v613 = vunpack.c.l.b16 %v581
    %v614 = vunpack.c.l.b16 %v582
    %v615 = vunpack.c.l.b16 %v583
    %v616 = vunpack.c.l.b16 %v584
    %v617 = vunpack.c.l.b16 %v585
    %v618 = vunpack.c.l.b16 %v586
    %v619 = vunpack.c.l.b16 %v587
    %v620 = vunpack.c.l.b16 %v588
    %v621 = vunpack.c.l.b16 %v589
    %v622 = vpack.c.b16 %v611, %v610
    %v623 = vpack.c.b16 %v613, %v612
    %v624 = vpack.c.b16 %v615, %v614
    %v625 = vpack.c.b16 %v617, %v616
    %v626 = vpack.c.b16 %v619, %v618
    %v627 = vpack.c.b16 %v621, %v620
    %vm634 = vcmask 785408
    %v636 = vsel %vm634, %v597, 0
    %638 = vmatpush.bf16.msra.mxu0 0
    %639 = vmatpush.bf16.msra.mxu0 0
    %640 = vmatpush.bf16.msra.mxu0 %v627
    %641 = vmatpush.bf16.msra.mxu0 %v626
    %642 = vmatpush.bf16.msra.mxu0 %v625
    %643 = vmatpush.bf16.msra.mxu0 %v624
    %644 = vmatpush.bf16.msra.mxu0 %v623
    %645 = vmatpush.bf16.msra.mxu0 %v622
    %646 = vmatmul.bf16.gmra.mxu0 %v636
    %v647 = vpop.f32.mrf.mxu0
    %v648 = vadd.f32 %v591, %v647
    %v649 = vpop.f32.mrf.mxu0
    %v650 = vadd.f32 %v591, %v649
    %651 = vdwg.mxu0
    %v652 = vmax.f32 %v648, 0.0
    %v653 = vmax.f32 %v650, 0.0
    %v656 = vrot.slane %v652, 2
    %v657 = vrot.slane %v652, 4
    %v658 = vrot.slane %v652, 6
    %v659 = vrot.slane %v653, 2
    %v660 = vrot.slane %v653, 4
    %v661 = vrot.slane %v653, 6
    %vm668 = vcmask 517120
    %v669 = vsel %vm668, %v652, -inf
    %v670 = vrot.slane %v669, 4
    %v671 = vmax.f32 %v669, %v670
    %v672 = vrot.slane %v671, 2
    %v673 = vmax.f32 %v671, %v672
    %v674 = vrot.slane %v673, 1
    %v675 = vmax.f32 %v673, %v674
    %v676 = vsel %vm668, %v656, -inf
    %v677 = vrot.slane %v676, 4
    %v678 = vmax.f32 %v676, %v677
    %v679 = vrot.slane %v678, 2
    %v680 = vmax.f32 %v678, %v679
    %v681 = vrot.slane %v680, 1
    %v682 = vmax.f32 %v680, %v681
    %v683 = vsel %vm668, %v657, -inf
    %v684 = vrot.slane %v683, 4
    %v685 = vmax.f32 %v683, %v684
    %v686 = vrot.slane %v685, 2
    %v687 = vmax.f32 %v685, %v686
    %v688 = vrot.slane %v687, 1
    %v689 = vmax.f32 %v687, %v688
    %v690 = vsel %vm668, %v658, -inf
    %v691 = vrot.slane %v690, 4
    %v692 = vmax.f32 %v690, %v691
    %v693 = vrot.slane %v692, 2
    %v694 = vmax.f32 %v692, %v693
    %v695 = vrot.slane %v694, 1
    %v696 = vmax.f32 %v694, %v695
    %v697 = vsel %vm668, %v653, -inf
    %v698 = vrot.slane %v697, 4
    %v699 = vmax.f32 %v697, %v698
    %v700 = vrot.slane %v699, 2
    %v701 = vmax.f32 %v699, %v700
    %v702 = vrot.slane %v701, 1
    %v703 = vmax.f32 %v701, %v702
    %v704 = vsel %vm668, %v659, -inf
    %v705 = vrot.slane %v704, 4
    %v706 = vmax.f32 %v704, %v705
    %v707 = vrot.slane %v706, 2
    %v708 = vmax.f32 %v706, %v707
    %v709 = vrot.slane %v708, 1
    %v710 = vmax.f32 %v708, %v709
    %v711 = vsel %vm668, %v660, -inf
    %v712 = vrot.slane %v711, 4
    %v713 = vmax.f32 %v711, %v712
    %v714 = vrot.slane %v713, 2
    %v715 = vmax.f32 %v713, %v714
    %v716 = vrot.slane %v715, 1
    %v717 = vmax.f32 %v715, %v716
    %v718 = vsel %vm668, %v661, -inf
    %v719 = vrot.slane %v718, 4
    %v720 = vmax.f32 %v718, %v719
    %v721 = vrot.slane %v720, 2
    %v722 = vmax.f32 %v720, %v721
    %v723 = vrot.slane %v722, 1
    %v724 = vmax.f32 %v722, %v723
    %v725 = vpack.c.bf16 %v675, %v675
    %v726 = vpack.c.bf16 %v682, %v682
    %v727 = vpack.c.bf16 %v689, %v689
    %v728 = vpack.c.bf16 %v696, %v696
    %v729 = vpack.c.bf16 %v703, %v703
    %v730 = vpack.c.bf16 %v710, %v710
    %v731 = vpack.c.bf16 %v717, %v717
    %v732 = vpack.c.bf16 %v724, %v724
    %v733 = vld [vmem:[#allocation5] sm:$0xf]
    %v734 = vld [vmem:[#allocation5 + $0x4] sm:$0xf]
    %v735 = vld [vmem:[#allocation5 + $0x8] sm:$0xf]
    %v736 = vld [vmem:[#allocation5 + $0xc] sm:$0xf]
    %v737 = vld [vmem:[#allocation5 + $0x10] sm:$0xf]
    %v738 = vld [vmem:[#allocation5 + $0x14] sm:$0xf]
    %v739 = vld [vmem:[#allocation5 + $0x18] sm:$0xf]
    %v740 = vld [vmem:[#allocation5 + $0x1c] sm:$0xf]
    %v741 = vld [vmem:[%s8] sm:$0x1]
    %v743 = vperm.slane %v741, 0
    %v753 = vunpack.c.l.b16 %v725
    %v754 = vunpack.c.l.b16 %v726
    %v755 = vunpack.c.l.b16 %v727
    %v756 = vunpack.c.l.b16 %v728
    %v757 = vunpack.c.l.b16 %v729
    %v758 = vunpack.c.l.b16 %v730
    %v759 = vunpack.c.l.b16 %v731
    %v760 = vunpack.c.l.b16 %v732
    %vm761 = vcmask 1041409
    %v762 = vsel %vm761, %v754, %v753
    %v763 = vsel %vm513, %v755, %v762
    %v764 = vsel %vm515, %v756, %v763
    %v765 = vsel %vm517, %v757, %v764
    %v766 = vsel %vm519, %v758, %v765
    %v767 = vsel %vm521, %v759, %v766
    %v768 = vsel %vm523, %v760, %v767
    %v769 = vpack.c.b16 %v768, %v768
    %v778 = vunpack.c.l.b16 %v733
    %v779 = vunpack.c.l.b16 %v734
    %v780 = vunpack.c.l.b16 %v735
    %v781 = vunpack.c.l.b16 %v736
    %v782 = vunpack.c.l.b16 %v737
    %v783 = vunpack.c.l.b16 %v738
    %v784 = vunpack.c.l.b16 %v739
    %v785 = vunpack.c.l.b16 %v740
    %v786 = vpack.c.b16 %v779, %v778
    %v787 = vpack.c.b16 %v781, %v780
    %v788 = vpack.c.b16 %v783, %v782
    %v789 = vpack.c.b16 %v785, %v784
    %v795 = vsel %vm573, %v769, 0
    %797 = vmatpush.bf16.msra.mxu0 0
    %798 = vmatpush.bf16.msra.mxu0 0
    %799 = vmatpush.bf16.msra.mxu0 0
    %800 = vmatpush.bf16.msra.mxu0 0
    %801 = vmatpush.bf16.msra.mxu0 %v789
    %802 = vmatpush.bf16.msra.mxu0 %v788
    %803 = vmatpush.bf16.msra.mxu0 %v787
    %804 = vmatpush.bf16.msra.mxu0 %v786
    %805 = vmatmul.bf16.gmra.mxu0 %v795
    %v806 = vpop.f32.mrf.mxu0
    %v807 = vadd.f32 %v743, %v806
    %v808 = vpop.f32.mrf.mxu0
    %809 = vdwg.mxu0
    %v811 = vrot.slane %v807, 4
    %v813 = vld [vmem:[#allocation7] sm:$0xf]
    %v814 = vld [vmem:[#allocation7 + $0x4] sm:$0xf]
    %v815 = vld [vmem:[#allocation8] sm:$0xf]
    %v816 = vld [vmem:[#allocation8 + $0x4] sm:$0xf]
    %v819 = vunpack.c.l.b16 %v813
    %v820 = vunpack.c.l.b16 %v814
    %v821 = vpack.c.b16 %v820, %v819
    %vm823 = vcmask 130048
    %v825 = vsel %vm823, 0, 0
    %827 = vmatpush.bf16.msra.mxu0 0
    %828 = vmatpush.bf16.msra.mxu0 0
    %829 = vmatpush.bf16.msra.mxu0 0
    %830 = vmatpush.bf16.msra.mxu0 0
    %831 = vmatpush.bf16.msra.mxu0 0
    %832 = vmatpush.bf16.msra.mxu0 0
    %833 = vmatpush.bf16.msra.mxu0 0
    %834 = vmatpush.bf16.msra.mxu0 %v821
    %835 = vmatmul.bf16.gmra.mxu0 %v825
    %v836 = vpop.f32.mrf.mxu0
    %v837 = vadd.f32 0.0, %v836
    %v838 = vpop.f32.mrf.mxu0
    %839 = vdwg.mxu0
    %v841 = vrot.slane %v837, 1
    %v844 = vadd.f32 %v807, %v837
    %v845 = vadd.f32 %v811, %v841
    %v848 = vunpack.c.l.b16 %v815
    %v849 = vunpack.c.l.b16 %v816
    %v850 = vpack.c.b16 %v849, %v848
    %852 = vmatpush.bf16.msra.mxu0 0
    %853 = vmatpush.bf16.msra.mxu0 0
    %854 = vmatpush.bf16.msra.mxu0 0
    %855 = vmatpush.bf16.msra.mxu0 0
    %856 = vmatpush.bf16.msra.mxu0 0
    %857 = vmatpush.bf16.msra.mxu0 0
    %858 = vmatpush.bf16.msra.mxu0 0
    %859 = vmatpush.bf16.msra.mxu0 %v850
    %860 = vmatmul.bf16.gmra.mxu0 %v825
    %v861 = vpop.f32.mrf.mxu0
    %v862 = vadd.f32 0.0, %v861
    %v863 = vpop.f32.mrf.mxu0
    %864 = vdwg.mxu0
    %v866 = vrot.slane %v862, 5
    %v867 = vrot.slane %v862, 6
    %868 = vrot.lane.b32.xlu0 %v866, 64
    %v869 = vpop.permute.xlu0 %868
    %870 = vrot.lane.b32.xlu0 %v867, 64
    %v871 = vpop.permute.xlu0 %870
    %v874 = vadd.f32 %v807, %v869
    %v875 = vadd.f32 %v811, %v871
    %v876 = vxor.u32 %v844, 2147483648
    %v877 = vxor.u32 %v845, 2147483648
    %v878 = vmul.f32 %v876, 1.442695
    %v879 = vpow.pop %v878
    %v880 = vmul.f32 %v877, 1.442695
    %v881 = vpow.pop %v880
    %v882 = vadd.f32 %v879, 1.0
    %v883 = vadd.f32 %v881, 1.0
    %v884 = vrcp.pop %v882
    %v885 = vmul.f32 %v882, %v884
    %v886 = vsub.f32 1.0, %v885
    %v887 = vmul.f32 %v884, %v886
    %v888 = vadd.f32 %v884, %v887
    %vm889 = vweird.f32 %v882
    %vm890 = vweird.f32 %v884
    %vm891 = vmor %vm889, %vm890
    %v892 = vsel %vm891, %v884, %v888
    %v893 = vand.u32 2147483647, %v882
    %vm894 = vcmp.eq.f32.partialorder %v893, 8.507059e+37
    %v895 = vand.u32 %v882, 2147483648
    %v896 = vor.u32 1.1754944e-38, %v895
    %v897 = vsel %vm894, %v896, %v892
    %v898 = vmul.f32 1.0, %v897
    %v899 = vrcp.pop %v883
    %v900 = vmul.f32 %v883, %v899
    %v901 = vsub.f32 1.0, %v900
    %v902 = vmul.f32 %v899, %v901
    %v903 = vadd.f32 %v899, %v902
    %vm904 = vweird.f32 %v883
    %vm905 = vweird.f32 %v899
    %vm906 = vmor %vm904, %vm905
    %v907 = vsel %vm906, %v899, %v903
    %v908 = vand.u32 2147483647, %v883
    %vm909 = vcmp.eq.f32.partialorder %v908, 8.507059e+37
    %v910 = vand.u32 %v883, 2147483648
    %v911 = vor.u32 1.1754944e-38, %v910
    %v912 = vsel %vm909, %v911, %v907
    %v913 = vmul.f32 1.0, %v912
    %v914 = vxor.u32 %v874, 2147483648
    %v915 = vxor.u32 %v875, 2147483648
    %v916 = vmul.f32 %v914, 1.442695
    %v917 = vpow.pop %v916
    %v918 = vmul.f32 %v915, 1.442695
    %v919 = vpow.pop %v918
    %v920 = vadd.f32 %v917, 1.0
    %v921 = vadd.f32 %v919, 1.0
    %v922 = vrcp.pop %v920
    %v923 = vmul.f32 %v920, %v922
    %v924 = vsub.f32 1.0, %v923
    %v925 = vmul.f32 %v922, %v924
    %v926 = vadd.f32 %v922, %v925
    %vm927 = vweird.f32 %v920
    %vm928 = vweird.f32 %v922
    %vm929 = vmor %vm927, %vm928
    %v930 = vsel %vm929, %v922, %v926
    %v931 = vand.u32 2147483647, %v920
    %vm932 = vcmp.eq.f32.partialorder %v931, 8.507059e+37
    %v933 = vand.u32 %v920, 2147483648
    %v934 = vor.u32 1.1754944e-38, %v933
    %v935 = vsel %vm932, %v934, %v930
    %v936 = vmul.f32 1.0, %v935
    %v937 = vrcp.pop %v921
    %v938 = vmul.f32 %v921, %v937
    %v939 = vsub.f32 1.0, %v938
    %v940 = vmul.f32 %v937, %v939
    %v941 = vadd.f32 %v937, %v940
    %vm942 = vweird.f32 %v921
    %vm943 = vweird.f32 %v937
    %vm944 = vmor %vm942, %vm943
    %v945 = vsel %vm944, %v937, %v941
    %v946 = vand.u32 2147483647, %v921
    %vm947 = vcmp.eq.f32.partialorder %v946, 8.507059e+37
    %v948 = vand.u32 %v921, 2147483648
    %v949 = vor.u32 1.1754944e-38, %v948
    %v950 = vsel %vm947, %v949, %v945
    %v951 = vmul.f32 1.0, %v950
    %v952 = vtanh.pop %v844
    %v953 = vtanh.pop %v845
    %v954 = vtanh.pop %v874
    %v955 = vtanh.pop %v875
    %v956 = vmul.f32 %v898, 0.0
    %v957 = vmul.f32 %v913, 0.0
    %960 = vrot.lane.b32.xlu0 %v952, 80
    %v961 = vpop.permute.xlu0 %960
    %962 = vrot.lane.b32.xlu0 %v953, 80
    %v963 = vpop.permute.xlu0 %962
    %v966 = vmul.f32 %v898, %v961
    %v967 = vmul.f32 %v913, %v963
    %970 = vrot.lane.b32.xlu0 %v966, 16
    %v971 = vpop.permute.xlu0 %970
    %972 = vrot.lane.b32.xlu0 %v967, 16
    %v973 = vpop.permute.xlu0 %972
    %v976 = vadd.f32 %v956, %v971
    %v977 = vadd.f32 %v957, %v973
    %v978 = vmul.f32 %v936, 0.0
    %v979 = vmul.f32 %v951, 0.0
    %982 = vrot.lane.b32.xlu0 %v954, 80
    %v983 = vpop.permute.xlu0 %982
    %984 = vrot.lane.b32.xlu0 %v955, 80
    %v985 = vpop.permute.xlu0 %984
    %v988 = vmul.f32 %v936, %v983
    %v989 = vmul.f32 %v951, %v985
    %992 = vrot.lane.b32.xlu0 %v988, 16
    %v993 = vpop.permute.xlu0 %992
    %994 = vrot.lane.b32.xlu0 %v989, 16
    %v995 = vpop.permute.xlu0 %994
    %v998 = vadd.f32 %v978, %v993
    %v999 = vadd.f32 %v979, %v995
    %v1000 = vtanh.pop %v976
    %v1001 = vtanh.pop %v977
    %1004 = vrot.lane.b32.xlu0 %v1000, 16
    %v1005 = vpop.permute.xlu0 %1004
    %1006 = vrot.lane.b32.xlu0 %v1001, 16
    %v1007 = vpop.permute.xlu0 %1006
    %v1010 = vmul.f32 %v898, %v1005
    %v1011 = vmul.f32 %v913, %v1007
    %v1012 = vtanh.pop %v998
    %v1013 = vtanh.pop %v999
    %1016 = vrot.lane.b32.xlu0 %v1012, 16
    %v1017 = vpop.permute.xlu0 %1016
    %1018 = vrot.lane.b32.xlu0 %v1013, 16
    %v1019 = vpop.permute.xlu0 %1018
    %v1022 = vmul.f32 %v936, %v1017
    %v1023 = vmul.f32 %v951, %v1019
    %v1024 = vadd.f32 %v1010, 0.0
    %v1025 = vadd.f32 %v1011, 0.0
    %v1026 = vadd.f32 %v1022, 0.0
    %v1027 = vadd.f32 %v1023, 0.0
    %v1028 = vpack.c.bf16 %v1010, %v1010
    %v1029 = vpack.c.bf16 %v1011, %v1011
    %v1032 = vunpack.c.l.b16 %v1028
    %v1033 = vunpack.c.l.b16 %v1029
    %v1034 = vrot.slane %v1033, 7
    %v1035 = vsel %vm761, %v1034, %v1032
    %v1036 = vpack.c.b16 %v1035, %v1035
    %1037 = vrot.lane.b32.xlu0 %v1036, 96
    %v1038 = vpop.permute.xlu0 %1037
    %v1040 = vsel %vm823, %v1038, 0
    %1042 = vmatpush.bf16.msra.mxu0 0
    %1043 = vmatpush.bf16.msra.mxu0 0
    %1044 = vmatpush.bf16.msra.mxu0 0
    %1045 = vmatpush.bf16.msra.mxu0 0
    %1046 = vmatpush.bf16.msra.mxu0 0
    %1047 = vmatpush.bf16.msra.mxu0 0
    %1048 = vmatpush.bf16.msra.mxu0 0
    %1049 = vmatpush.bf16.msra.mxu0 %v821
    %1050 = vmatmul.bf16.gmra.mxu0 %v1040
    %v1051 = vpop.f32.mrf.mxu0
    %v1052 = vadd.f32 0.0, %v1051
    %v1053 = vpop.f32.mrf.mxu0
    %1054 = vdwg.mxu0
    %v1056 = vrot.slane %v1052, 7
    %v1059 = vadd.f32 %v807, %v1056
    %v1060 = vadd.f32 %v811, %v1052
    %v1061 = vpack.c.bf16 %v1022, %v1022
    %v1062 = vpack.c.bf16 %v1023, %v1023
    %v1065 = vunpack.c.l.b16 %v1061
    %v1066 = vunpack.c.l.b16 %v1062
    %v1067 = vrot.slane %v1065, 3
    %v1068 = vrot.slane %v1066, 2
    %v1069 = vsel %vm761, %v1068, %v1067
    %v1070 = vpack.c.b16 %v1069, %v1069
    %1071 = vrot.lane.b32.xlu0 %v1070, 32
    %v1072 = vpop.permute.xlu0 %1071
    %v1074 = vsel %vm823, %v1072, 0
    %1076 = vmatpush.bf16.msra.mxu0 0
    %1077 = vmatpush.bf16.msra.mxu0 0
    %1078 = vmatpush.bf16.msra.mxu0 0
    %1079 = vmatpush.bf16.msra.mxu0 0
    %1080 = vmatpush.bf16.msra.mxu0 0
    %1081 = vmatpush.bf16.msra.mxu0 0
    %1082 = vmatpush.bf16.msra.mxu0 0
    %1083 = vmatpush.bf16.msra.mxu0 %v850
    %1084 = vmatmul.bf16.gmra.mxu0 %v1074
    %v1085 = vpop.f32.mrf.mxu0
    %v1086 = vadd.f32 0.0, %v1085
    %v1087 = vpop.f32.mrf.mxu0
    %1088 = vdwg.mxu0
    %v1090 = vrot.slane %v1086, 6
    %v1091 = vrot.slane %v1086, 7
    %1092 = vrot.lane.b32.xlu0 %v1090, 64
    %v1093 = vpop.permute.xlu0 %1092
    %1094 = vrot.lane.b32.xlu0 %v1091, 64
    %v1095 = vpop.permute.xlu0 %1094
    %v1098 = vadd.f32 %v807, %v1093
    %v1099 = vadd.f32 %v811, %v1095
    %v1100 = vxor.u32 %v1059, 2147483648
    %v1101 = vxor.u32 %v1060, 2147483648
    %v1102 = vmul.f32 %v1100, 1.442695
    %v1103 = vpow.pop %v1102
    %v1104 = vmul.f32 %v1101, 1.442695
    %v1105 = vpow.pop %v1104
    %v1106 = vadd.f32 %v1103, 1.0
    %v1107 = vadd.f32 %v1105, 1.0
    %v1108 = vrcp.pop %v1106
    %v1109 = vmul.f32 %v1106, %v1108
    %v1110 = vsub.f32 1.0, %v1109
    %v1111 = vmul.f32 %v1108, %v1110
    %v1112 = vadd.f32 %v1108, %v1111
    %vm1113 = vweird.f32 %v1106
    %vm1114 = vweird.f32 %v1108
    %vm1115 = vmor %vm1113, %vm1114
    %v1116 = vsel %vm1115, %v1108, %v1112
    %v1117 = vand.u32 2147483647, %v1106
    %vm1118 = vcmp.eq.f32.partialorder %v1117, 8.507059e+37
    %v1119 = vand.u32 %v1106, 2147483648
    %v1120 = vor.u32 1.1754944e-38, %v1119
    %v1121 = vsel %vm1118, %v1120, %v1116
    %v1122 = vmul.f32 1.0, %v1121
    %v1123 = vrcp.pop %v1107
    %v1124 = vmul.f32 %v1107, %v1123
    %v1125 = vsub.f32 1.0, %v1124
    %v1126 = vmul.f32 %v1123, %v1125
    %v1127 = vadd.f32 %v1123, %v1126
    %vm1128 = vweird.f32 %v1107
    %vm1129 = vweird.f32 %v1123
    %vm1130 = vmor %vm1128, %vm1129
    %v1131 = vsel %vm1130, %v1123, %v1127
    %v1132 = vand.u32 2147483647, %v1107
    %vm1133 = vcmp.eq.f32.partialorder %v1132, 8.507059e+37
    %v1134 = vand.u32 %v1107, 2147483648
    %v1135 = vor.u32 1.1754944e-38, %v1134
    %v1136 = vsel %vm1133, %v1135, %v1131
    %v1137 = vmul.f32 1.0, %v1136
    %v1138 = vxor.u32 %v1098, 2147483648
    %v1139 = vxor.u32 %v1099, 2147483648
    %v1140 = vmul.f32 %v1138, 1.442695
    %v1141 = vpow.pop %v1140
    %v1142 = vmul.f32 %v1139, 1.442695
    %v1143 = vpow.pop %v1142
    %v1144 = vadd.f32 %v1141, 1.0
    %v1145 = vadd.f32 %v1143, 1.0
    %v1146 = vrcp.pop %v1144
    %v1147 = vmul.f32 %v1144, %v1146
    %v1148 = vsub.f32 1.0, %v1147
    %v1149 = vmul.f32 %v1146, %v1148
    %v1150 = vadd.f32 %v1146, %v1149
    %vm1151 = vweird.f32 %v1144
    %vm1152 = vweird.f32 %v1146
    %vm1153 = vmor %vm1151, %vm1152
    %v1154 = vsel %vm1153, %v1146, %v1150
    %v1155 = vand.u32 2147483647, %v1144
    %vm1156 = vcmp.eq.f32.partialorder %v1155, 8.507059e+37
    %v1157 = vand.u32 %v1144, 2147483648
    %v1158 = vor.u32 1.1754944e-38, %v1157
    %v1159 = vsel %vm1156, %v1158, %v1154
    %v1160 = vmul.f32 1.0, %v1159
    %v1161 = vrcp.pop %v1145
    %v1162 = vmul.f32 %v1145, %v1161
    %v1163 = vsub.f32 1.0, %v1162
    %v1164 = vmul.f32 %v1161, %v1163
    %v1165 = vadd.f32 %v1161, %v1164
    %vm1166 = vweird.f32 %v1145
    %vm1167 = vweird.f32 %v1161
    %vm1168 = vmor %vm1166, %vm1167
    %v1169 = vsel %vm1168, %v1161, %v1165
    %v1170 = vand.u32 2147483647, %v1145
    %vm1171 = vcmp.eq.f32.partialorder %v1170, 8.507059e+37
    %v1172 = vand.u32 %v1145, 2147483648
    %v1173 = vor.u32 1.1754944e-38, %v1172
    %v1174 = vsel %vm1171, %v1173, %v1169
    %v1175 = vmul.f32 1.0, %v1174
    %v1176 = vtanh.pop %v1059
    %v1177 = vtanh.pop %v1060
    %v1178 = vtanh.pop %v1098
    %v1179 = vtanh.pop %v1099
    %v1182 = vrot.slane %v976, 7
    %v1183 = vrot.slane %v977, 7
    %v1186 = vmul.f32 %v1122, %v1182
    %v1187 = vmul.f32 %v1137, %v1183
    %1190 = vrot.lane.b32.xlu0 %v1176, 80
    %v1191 = vpop.permute.xlu0 %1190
    %1192 = vrot.lane.b32.xlu0 %v1177, 80
    %v1193 = vpop.permute.xlu0 %1192
    %v1196 = vmul.f32 %v1122, %v1191
    %v1197 = vmul.f32 %v1137, %v1193
    %1200 = vrot.lane.b32.xlu0 %v1196, 16
    %v1201 = vpop.permute.xlu0 %1200
    %1202 = vrot.lane.b32.xlu0 %v1197, 16
    %v1203 = vpop.permute.xlu0 %1202
    %v1206 = vadd.f32 %v1186, %v1201
    %v1207 = vadd.f32 %v1187, %v1203
    %v1210 = vrot.slane %v998, 5
    %v1211 = vrot.slane %v1210, 4
    %v1212 = vrot.slane %v999, 5
    %v1213 = vrot.slane %v1212, 4
    %v1216 = vmul.f32 %v1160, %v1211
    %v1217 = vmul.f32 %v1175, %v1213
    %1220 = vrot.lane.b32.xlu0 %v1178, 80
    %v1221 = vpop.permute.xlu0 %1220
    %1222 = vrot.lane.b32.xlu0 %v1179, 80
    %v1223 = vpop.permute.xlu0 %1222
    %v1226 = vmul.f32 %v1160, %v1221
    %v1227 = vmul.f32 %v1175, %v1223
    %1230 = vrot.lane.b32.xlu0 %v1226, 16
    %v1231 = vpop.permute.xlu0 %1230
    %1232 = vrot.lane.b32.xlu0 %v1227, 16
    %v1233 = vpop.permute.xlu0 %1232
    %v1236 = vadd.f32 %v1216, %v1231
    %v1237 = vadd.f32 %v1217, %v1233
    %v1238 = vtanh.pop %v1206
    %v1239 = vtanh.pop %v1207
    %1242 = vrot.lane.b32.xlu0 %v1238, 16
    %v1243 = vpop.permute.xlu0 %1242
    %1244 = vrot.lane.b32.xlu0 %v1239, 16
    %v1245 = vpop.permute.xlu0 %1244
    %v1248 = vmul.f32 %v1122, %v1243
    %v1249 = vmul.f32 %v1137, %v1245
    %v1250 = vtanh.pop %v1236
    %v1251 = vtanh.pop %v1237
    %1254 = vrot.lane.b32.xlu0 %v1250, 16
    %v1255 = vpop.permute.xlu0 %1254
    %1256 = vrot.lane.b32.xlu0 %v1251, 16
    %v1257 = vpop.permute.xlu0 %1256
    %v1260 = vmul.f32 %v1160, %v1255
    %v1261 = vmul.f32 %v1175, %v1257
    %v1264 = vrot.slane %v1248, 5
    %v1265 = vrot.slane %v1264, 4
    %v1266 = vrot.slane %v1249, 5
    %v1267 = vrot.slane %v1266, 4
    %v1270 = vadd.f32 %v1024, %v1265
    %v1271 = vadd.f32 %v1025, %v1267
    %v1274 = vrot.slane %v1260, 7
    %v1275 = vrot.slane %v1261, 7
    %v1278 = vadd.f32 %v1026, %v1274
    %v1279 = vadd.f32 %v1027, %v1275
    %v1280 = vpack.c.bf16 %v1248, %v1248
    %v1281 = vpack.c.bf16 %v1249, %v1249
    %v1284 = vunpack.c.l.b16 %v1280
    %v1285 = vunpack.c.l.b16 %v1281
    %v1286 = vrot.slane %v1284, 1
    %v1287 = vsel %vm761, %v1285, %v1286
    %v1288 = vpack.c.b16 %v1287, %v1287
    %1289 = vrot.lane.b32.xlu0 %v1288, 96
    %v1290 = vpop.permute.xlu0 %1289
    %v1292 = vsel %vm823, %v1290, 0
    %1294 = vmatpush.bf16.msra.mxu0 0
    %1295 = vmatpush.bf16.msra.mxu0 0
    %1296 = vmatpush.bf16.msra.mxu0 0
    %1297 = vmatpush.bf16.msra.mxu0 0
    %1298 = vmatpush.bf16.msra.mxu0 0
    %1299 = vmatpush.bf16.msra.mxu0 0
    %1300 = vmatpush.bf16.msra.mxu0 0
    %1301 = vmatpush.bf16.msra.mxu0 %v821
    %1302 = vmatmul.bf16.gmra.mxu0 %v1292
    %v1303 = vpop.f32.mrf.mxu0
    %v1304 = vadd.f32 0.0, %v1303
    %v1305 = vpop.f32.mrf.mxu0
    %1306 = vdwg.mxu0
    %v1308 = vrot.slane %v1304, 6
    %v1309 = vrot.slane %v1304, 7
    %v1312 = vadd.f32 %v807, %v1308
    %v1313 = vadd.f32 %v811, %v1309
    %v1314 = vpack.c.bf16 %v1260, %v1260
    %v1315 = vpack.c.bf16 %v1261, %v1261
    %v1318 = vunpack.c.l.b16 %v1314
    %v1319 = vunpack.c.l.b16 %v1315
    %v1320 = vrot.slane %v1318, 2
    %v1321 = vrot.slane %v1319, 1
    %v1322 = vsel %vm761, %v1321, %v1320
    %v1323 = vpack.c.b16 %v1322, %v1322
    %1324 = vrot.lane.b32.xlu0 %v1323, 32
    %v1325 = vpop.permute.xlu0 %1324
    %v1327 = vsel %vm823, %v1325, 0
    %1329 = vmatpush.bf16.msra.mxu0 0
    %1330 = vmatpush.bf16.msra.mxu0 0
    %1331 = vmatpush.bf16.msra.mxu0 0
    %1332 = vmatpush.bf16.msra.mxu0 0
    %1333 = vmatpush.bf16.msra.mxu0 0
    %1334 = vmatpush.bf16.msra.mxu0 0
    %1335 = vmatpush.bf16.msra.mxu0 0
    %1336 = vmatpush.bf16.msra.mxu0 %v850
    %1337 = vmatmul.bf16.gmra.mxu0 %v1327
    %v1338 = vpop.f32.mrf.mxu0
    %v1339 = vadd.f32 0.0, %v1338
    %v1340 = vpop.f32.mrf.mxu0
    %1341 = vdwg.mxu0
    %v1343 = vrot.slane %v1339, 7
    %1344 = vrot.lane.b32.xlu0 %v1343, 64
    %v1345 = vpop.permute.xlu0 %1344
    %1346 = vrot.lane.b32.xlu0 %v1339, 64
    %v1347 = vpop.permute.xlu0 %1346
    %v1350 = vadd.f32 %v807, %v1345
    %v1351 = vadd.f32 %v811, %v1347
    %v1352 = vxor.u32 %v1312, 2147483648
    %v1353 = vxor.u32 %v1313, 2147483648
    %v1354 = vmul.f32 %v1352, 1.442695
    %v1355 = vpow.pop %v1354
    %v1356 = vmul.f32 %v1353, 1.442695
    %v1357 = vpow.pop %v1356
    %v1358 = vadd.f32 %v1355, 1.0
    %v1359 = vadd.f32 %v1357, 1.0
    %v1360 = vrcp.pop %v1358
    %v1361 = vmul.f32 %v1358, %v1360
    %v1362 = vsub.f32 1.0, %v1361
    %v1363 = vmul.f32 %v1360, %v1362
    %v1364 = vadd.f32 %v1360, %v1363
    %vm1365 = vweird.f32 %v1358
    %vm1366 = vweird.f32 %v1360
    %vm1367 = vmor %vm1365, %vm1366
    %v1368 = vsel %vm1367, %v1360, %v1364
    %v1369 = vand.u32 2147483647, %v1358
    %vm1370 = vcmp.eq.f32.partialorder %v1369, 8.507059e+37
    %v1371 = vand.u32 %v1358, 2147483648
    %v1372 = vor.u32 1.1754944e-38, %v1371
    %v1373 = vsel %vm1370, %v1372, %v1368
    %v1374 = vmul.f32 1.0, %v1373
    %v1375 = vrcp.pop %v1359
    %v1376 = vmul.f32 %v1359, %v1375
    %v1377 = vsub.f32 1.0, %v1376
    %v1378 = vmul.f32 %v1375, %v1377
    %v1379 = vadd.f32 %v1375, %v1378
    %vm1380 = vweird.f32 %v1359
    %vm1381 = vweird.f32 %v1375
    %vm1382 = vmor %vm1380, %vm1381
    %v1383 = vsel %vm1382, %v1375, %v1379
    %v1384 = vand.u32 2147483647, %v1359
    %vm1385 = vcmp.eq.f32.partialorder %v1384, 8.507059e+37
    %v1386 = vand.u32 %v1359, 2147483648
    %v1387 = vor.u32 1.1754944e-38, %v1386
    %v1388 = vsel %vm1385, %v1387, %v1383
    %v1389 = vmul.f32 1.0, %v1388
    %v1390 = vxor.u32 %v1350, 2147483648
    %v1391 = vxor.u32 %v1351, 2147483648
    %v1392 = vmul.f32 %v1390, 1.442695
    %v1393 = vpow.pop %v1392
    %v1394 = vmul.f32 %v1391, 1.442695
    %v1395 = vpow.pop %v1394
    %v1396 = vadd.f32 %v1393, 1.0
    %v1397 = vadd.f32 %v1395, 1.0
    %v1398 = vrcp.pop %v1396
    %v1399 = vmul.f32 %v1396, %v1398
    %v1400 = vsub.f32 1.0, %v1399
    %v1401 = vmul.f32 %v1398, %v1400
    %v1402 = vadd.f32 %v1398, %v1401
    %vm1403 = vweird.f32 %v1396
    %vm1404 = vweird.f32 %v1398
    %vm1405 = vmor %vm1403, %vm1404
    %v1406 = vsel %vm1405, %v1398, %v1402
    %v1407 = vand.u32 2147483647, %v1396
    %vm1408 = vcmp.eq.f32.partialorder %v1407, 8.507059e+37
    %v1409 = vand.u32 %v1396, 2147483648
    %v1410 = vor.u32 1.1754944e-38, %v1409
    %v1411 = vsel %vm1408, %v1410, %v1406
    %v1412 = vmul.f32 1.0, %v1411
    %v1413 = vrcp.pop %v1397
    %v1414 = vmul.f32 %v1397, %v1413
    %v1415 = vsub.f32 1.0, %v1414
    %v1416 = vmul.f32 %v1413, %v1415
    %v1417 = vadd.f32 %v1413, %v1416
    %vm1418 = vweird.f32 %v1397
    %vm1419 = vweird.f32 %v1413
    %vm1420 = vmor %vm1418, %vm1419
    %v1421 = vsel %vm1420, %v1413, %v1417
    %v1422 = vand.u32 2147483647, %v1397
    %vm1423 = vcmp.eq.f32.partialorder %v1422, 8.507059e+37
    %v1424 = vand.u32 %v1397, 2147483648
    %v1425 = vor.u32 1.1754944e-38, %v1424
    %v1426 = vsel %vm1423, %v1425, %v1421
    %v1427 = vmul.f32 1.0, %v1426
    %v1428 = vtanh.pop %v1312
    %v1429 = vtanh.pop %v1313
    %v1430 = vtanh.pop %v1350
    %v1431 = vtanh.pop %v1351
    %v1434 = vrot.slane %v1206, 7
    %v1435 = vrot.slane %v1207, 7
    %v1438 = vmul.f32 %v1374, %v1434
    %v1439 = vmul.f32 %v1389, %v1435
    %1442 = vrot.lane.b32.xlu0 %v1428, 80
    %v1443 = vpop.permute.xlu0 %1442
    %1444 = vrot.lane.b32.xlu0 %v1429, 80
    %v1445 = vpop.permute.xlu0 %1444
    %v1448 = vmul.f32 %v1374, %v1443
    %v1449 = vmul.f32 %v1389, %v1445
    %1452 = vrot.lane.b32.xlu0 %v1448, 16
    %v1453 = vpop.permute.xlu0 %1452
    %1454 = vrot.lane.b32.xlu0 %v1449, 16
    %v1455 = vpop.permute.xlu0 %1454
    %v1458 = vadd.f32 %v1438, %v1453
    %v1459 = vadd.f32 %v1439, %v1455
    %v1462 = vrot.slane %v1236, 5
    %v1463 = vrot.slane %v1462, 4
    %v1464 = vrot.slane %v1237, 5
    %v1465 = vrot.slane %v1464, 4
    %v1468 = vmul.f32 %v1412, %v1463
    %v1469 = vmul.f32 %v1427, %v1465
    %1472 = vrot.lane.b32.xlu0 %v1430, 80
    %v1473 = vpop.permute.xlu0 %1472
    %1474 = vrot.lane.b32.xlu0 %v1431, 80
    %v1475 = vpop.permute.xlu0 %1474
    %v1478 = vmul.f32 %v1412, %v1473
    %v1479 = vmul.f32 %v1427, %v1475
    %1482 = vrot.lane.b32.xlu0 %v1478, 16
    %v1483 = vpop.permute.xlu0 %1482
    %1484 = vrot.lane.b32.xlu0 %v1479, 16
    %v1485 = vpop.permute.xlu0 %1484
    %v1488 = vadd.f32 %v1468, %v1483
    %v1489 = vadd.f32 %v1469, %v1485
    %v1490 = vtanh.pop %v1458
    %v1491 = vtanh.pop %v1459
    %1494 = vrot.lane.b32.xlu0 %v1490, 16
    %v1495 = vpop.permute.xlu0 %1494
    %1496 = vrot.lane.b32.xlu0 %v1491, 16
    %v1497 = vpop.permute.xlu0 %1496
    %v1500 = vmul.f32 %v1374, %v1495
    %v1501 = vmul.f32 %v1389, %v1497
    %v1502 = vtanh.pop %v1488
    %v1503 = vtanh.pop %v1489
    %1506 = vrot.lane.b32.xlu0 %v1502, 16
    %v1507 = vpop.permute.xlu0 %1506
    %1508 = vrot.lane.b32.xlu0 %v1503, 16
    %v1509 = vpop.permute.xlu0 %1508
    %v1512 = vmul.f32 %v1412, %v1507
    %v1513 = vmul.f32 %v1427, %v1509
    %v1516 = vrot.slane %v1500, 6
    %v1517 = vrot.slane %v1516, 4
    %v1518 = vrot.slane %v1501, 6
    %v1519 = vrot.slane %v1518, 4
    %v1522 = vadd.f32 %v1270, %v1517
    %v1523 = vadd.f32 %v1271, %v1519
    %v1526 = vrot.slane %v1512, 6
    %v1527 = vrot.slane %v1513, 6
    %v1530 = vadd.f32 %v1278, %v1526
    %v1531 = vadd.f32 %v1279, %v1527
    %v1532 = vpack.c.bf16 %v1500, %v1500
    %v1533 = vpack.c.bf16 %v1501, %v1501
    %v1536 = vunpack.c.l.b16 %v1532
    %v1537 = vunpack.c.l.b16 %v1533
    %v1538 = vrot.slane %v1536, 2
    %v1539 = vrot.slane %v1537, 1
    %v1540 = vsel %vm761, %v1539, %v1538
    %v1541 = vpack.c.b16 %v1540, %v1540
    %1542 = vrot.lane.b32.xlu0 %v1541, 96
    %v1543 = vpop.permute.xlu0 %1542
    %v1545 = vsel %vm823, %v1543, 0
    %1547 = vmatpush.bf16.msra.mxu0 0
    %1548 = vmatpush.bf16.msra.mxu0 0
    %1549 = vmatpush.bf16.msra.mxu0 0
    %1550 = vmatpush.bf16.msra.mxu0 0
    %1551 = vmatpush.bf16.msra.mxu0 0
    %1552 = vmatpush.bf16.msra.mxu0 0
    %1553 = vmatpush.bf16.msra.mxu0 0
    %1554 = vmatpush.bf16.msra.mxu0 %v821
    %1555 = vmatmul.bf16.gmra.mxu0 %v1545
    %v1556 = vpop.f32.mrf.mxu0
    %v1557 = vadd.f32 0.0, %v1556
    %v1558 = vpop.f32.mrf.mxu0
    %1559 = vdwg.mxu0
    %v1561 = vrot.slane %v1557, 5
    %v1562 = vrot.slane %v1557, 6
    %v1565 = vadd.f32 %v807, %v1561
    %v1566 = vadd.f32 %v811, %v1562
    %v1567 = vpack.c.bf16 %v1512, %v1512
    %v1568 = vpack.c.bf16 %v1513, %v1513
    %v1571 = vunpack.c.l.b16 %v1567
    %v1572 = vunpack.c.l.b16 %v1568
    %v1573 = vrot.slane %v1571, 1
    %v1574 = vsel %vm761, %v1572, %v1573
    %v1575 = vpack.c.b16 %v1574, %v1574
    %1576 = vrot.lane.b32.xlu0 %v1575, 32
    %v1577 = vpop.permute.xlu0 %1576
    %v1579 = vsel %vm823, %v1577, 0
    %1581 = vmatpush.bf16.msra.mxu0 0
    %1582 = vmatpush.bf16.msra.mxu0 0
    %1583 = vmatpush.bf16.msra.mxu0 0
    %1584 = vmatpush.bf16.msra.mxu0 0
    %1585 = vmatpush.bf16.msra.mxu0 0
    %1586 = vmatpush.bf16.msra.mxu0 0
    %1587 = vmatpush.bf16.msra.mxu0 0
    %1588 = vmatpush.bf16.msra.mxu0 %v850
    %1589 = vmatmul.bf16.gmra.mxu0 %v1579
    %v1590 = vpop.f32.mrf.mxu0
    %v1591 = vadd.f32 0.0, %v1590
    %v1592 = vpop.f32.mrf.mxu0
    %1593 = vdwg.mxu0
    %v1595 = vrot.slane %v1591, 1
    %1596 = vrot.lane.b32.xlu0 %v1591, 64
    %v1597 = vpop.permute.xlu0 %1596
    %1598 = vrot.lane.b32.xlu0 %v1595, 64
    %v1599 = vpop.permute.xlu0 %1598
    %v1602 = vadd.f32 %v807, %v1597
    %v1603 = vadd.f32 %v811, %v1599
    %v1604 = vxor.u32 %v1565, 2147483648
    %v1605 = vxor.u32 %v1566, 2147483648
    %v1606 = vmul.f32 %v1604, 1.442695
    %v1607 = vpow.pop %v1606
    %v1608 = vmul.f32 %v1605, 1.442695
    %v1609 = vpow.pop %v1608
    %v1610 = vadd.f32 %v1607, 1.0
    %v1611 = vadd.f32 %v1609, 1.0
    %v1612 = vrcp.pop %v1610
    %v1613 = vmul.f32 %v1610, %v1612
    %v1614 = vsub.f32 1.0, %v1613
    %v1615 = vmul.f32 %v1612, %v1614
    %v1616 = vadd.f32 %v1612, %v1615
    %vm1617 = vweird.f32 %v1610
    %vm1618 = vweird.f32 %v1612
    %vm1619 = vmor %vm1617, %vm1618
    %v1620 = vsel %vm1619, %v1612, %v1616
    %v1621 = vand.u32 2147483647, %v1610
    %vm1622 = vcmp.eq.f32.partialorder %v1621, 8.507059e+37
    %v1623 = vand.u32 %v1610, 2147483648
    %v1624 = vor.u32 1.1754944e-38, %v1623
    %v1625 = vsel %vm1622, %v1624, %v1620
    %v1626 = vmul.f32 1.0, %v1625
    %v1627 = vrcp.pop %v1611
    %v1628 = vmul.f32 %v1611, %v1627
    %v1629 = vsub.f32 1.0, %v1628
    %v1630 = vmul.f32 %v1627, %v1629
    %v1631 = vadd.f32 %v1627, %v1630
    %vm1632 = vweird.f32 %v1611
    %vm1633 = vweird.f32 %v1627
    %vm1634 = vmor %vm1632, %vm1633
    %v1635 = vsel %vm1634, %v1627, %v1631
    %v1636 = vand.u32 2147483647, %v1611
    %vm1637 = vcmp.eq.f32.partialorder %v1636, 8.507059e+37
    %v1638 = vand.u32 %v1611, 2147483648
    %v1639 = vor.u32 1.1754944e-38, %v1638
    %v1640 = vsel %vm1637, %v1639, %v1635
    %v1641 = vmul.f32 1.0, %v1640
    %v1642 = vxor.u32 %v1602, 2147483648
    %v1643 = vxor.u32 %v1603, 2147483648
    %v1644 = vmul.f32 %v1642, 1.442695
    %v1645 = vpow.pop %v1644
    %v1646 = vmul.f32 %v1643, 1.442695
    %v1647 = vpow.pop %v1646
    %v1648 = vadd.f32 %v1645, 1.0
    %v1649 = vadd.f32 %v1647, 1.0
    %v1650 = vrcp.pop %v1648
    %v1651 = vmul.f32 %v1648, %v1650
    %v1652 = vsub.f32 1.0, %v1651
    %v1653 = vmul.f32 %v1650, %v1652
    %v1654 = vadd.f32 %v1650, %v1653
    %vm1655 = vweird.f32 %v1648
    %vm1656 = vweird.f32 %v1650
    %vm1657 = vmor %vm1655, %vm1656
    %v1658 = vsel %vm1657, %v1650, %v1654
    %v1659 = vand.u32 2147483647, %v1648
    %vm1660 = vcmp.eq.f32.partialorder %v1659, 8.507059e+37
    %v1661 = vand.u32 %v1648, 2147483648
    %v1662 = vor.u32 1.1754944e-38, %v1661
    %v1663 = vsel %vm1660, %v1662, %v1658
    %v1664 = vmul.f32 1.0, %v1663
    %v1665 = vrcp.pop %v1649
    %v1666 = vmul.f32 %v1649, %v1665
    %v1667 = vsub.f32 1.0, %v1666
    %v1668 = vmul.f32 %v1665, %v1667
    %v1669 = vadd.f32 %v1665, %v1668
    %vm1670 = vweird.f32 %v1649
    %vm1671 = vweird.f32 %v1665
    %vm1672 = vmor %vm1670, %vm1671
    %v1673 = vsel %vm1672, %v1665, %v1669
    %v1674 = vand.u32 2147483647, %v1649
    %vm1675 = vcmp.eq.f32.partialorder %v1674, 8.507059e+37
    %v1676 = vand.u32 %v1649, 2147483648
    %v1677 = vor.u32 1.1754944e-38, %v1676
    %v1678 = vsel %vm1675, %v1677, %v1673
    %v1679 = vmul.f32 1.0, %v1678
    %v1680 = vtanh.pop %v1565
    %v1681 = vtanh.pop %v1566
    %v1682 = vtanh.pop %v1602
    %v1683 = vtanh.pop %v1603
    %v1686 = vrot.slane %v1458, 7
    %v1687 = vrot.slane %v1459, 7
    %v1690 = vmul.f32 %v1626, %v1686
    %v1691 = vmul.f32 %v1641, %v1687
    %1694 = vrot.lane.b32.xlu0 %v1680, 80
    %v1695 = vpop.permute.xlu0 %1694
    %1696 = vrot.lane.b32.xlu0 %v1681, 80
    %v1697 = vpop.permute.xlu0 %1696
    %v1700 = vmul.f32 %v1626, %v1695
    %v1701 = vmul.f32 %v1641, %v1697
    %1704 = vrot.lane.b32.xlu0 %v1700, 16
    %v1705 = vpop.permute.xlu0 %1704
    %1706 = vrot.lane.b32.xlu0 %v1701, 16
    %v1707 = vpop.permute.xlu0 %1706
    %v1710 = vadd.f32 %v1690, %v1705
    %v1711 = vadd.f32 %v1691, %v1707
    %v1714 = vrot.slane %v1488, 5
    %v1715 = vrot.slane %v1714, 4
    %v1716 = vrot.slane %v1489, 5
    %v1717 = vrot.slane %v1716, 4
    %v1720 = vmul.f32 %v1664, %v1715
    %v1721 = vmul.f32 %v1679, %v1717
    %1724 = vrot.lane.b32.xlu0 %v1682, 80
    %v1725 = vpop.permute.xlu0 %1724
    %1726 = vrot.lane.b32.xlu0 %v1683, 80
    %v1727 = vpop.permute.xlu0 %1726
    %v1730 = vmul.f32 %v1664, %v1725
    %v1731 = vmul.f32 %v1679, %v1727
    %1734 = vrot.lane.b32.xlu0 %v1730, 16
    %v1735 = vpop.permute.xlu0 %1734
    %1736 = vrot.lane.b32.xlu0 %v1731, 16
    %v1737 = vpop.permute.xlu0 %1736
    %v1740 = vadd.f32 %v1720, %v1735
    %v1741 = vadd.f32 %v1721, %v1737
    %v1742 = vtanh.pop %v1710
    %v1743 = vtanh.pop %v1711
    %1746 = vrot.lane.b32.xlu0 %v1742, 16
    %v1747 = vpop.permute.xlu0 %1746
    %1748 = vrot.lane.b32.xlu0 %v1743, 16
    %v1749 = vpop.permute.xlu0 %1748
    %v1752 = vmul.f32 %v1626, %v1747
    %v1753 = vmul.f32 %v1641, %v1749
    %v1754 = vtanh.pop %v1740
    %v1755 = vtanh.pop %v1741
    %1758 = vrot.lane.b32.xlu0 %v1754, 16
    %v1759 = vpop.permute.xlu0 %1758
    %1760 = vrot.lane.b32.xlu0 %v1755, 16
    %v1761 = vpop.permute.xlu0 %1760
    %v1764 = vmul.f32 %v1664, %v1759
    %v1765 = vmul.f32 %v1679, %v1761
    %v1768 = vrot.slane %v1752, 7
    %v1769 = vrot.slane %v1768, 4
    %v1770 = vrot.slane %v1753, 7
    %v1771 = vrot.slane %v1770, 4
    %v1774 = vadd.f32 %v1522, %v1769
    %v1775 = vadd.f32 %v1523, %v1771
    %v1778 = vrot.slane %v1764, 5
    %v1779 = vrot.slane %v1765, 5
    %v1782 = vadd.f32 %v1530, %v1778
    %v1783 = vadd.f32 %v1531, %v1779
    %v1786 = vperm.slane %v1774, 0
    %v1787 = vperm.slane %v1775, 0
    %v1788 = vsel %vm761, %v1787, %v1786
    %1789 = vrot.lane.b32.xlu0 %v1788, 96
    %v1790 = vpop.permute.xlu0 %1789
    %v1794 = vperm.slane %v1782, 3
    %v1795 = vperm.slane %v1783, 3
    %v1796 = vsel %vm761, %v1795, %v1794
    %1797 = vrot.lane.b32.xlu0 %v1796, 48
    %v1798 = vpop.permute.xlu0 %1797
    %v1800 = vsel %vm823, %v1790, %v1798
    %v1801 = vpack.c.bf16 %v1800, %v1800
    %v1802 = vld [vmem:[#allocation10] sm:$0xf]
    %v1803 = vld [vmem:[#allocation10 + $0x4] sm:$0xf]
    %v1804 = vld [vmem:[#allocation10 + $0x8] sm:$0xf]
    %v1805 = vld [vmem:[#allocation10 + $0xc] sm:$0xf]
    %v1806 = vld [vmem:[#allocation11] sm:$0x1]
    %v1808 = vperm.slane %v1806, 0
    %v1814 = vunpack.c.l.b16 %v1802
    %v1815 = vunpack.c.l.b16 %v1803
    %v1816 = vunpack.c.l.b16 %v1804
    %v1817 = vunpack.c.l.b16 %v1805
    %v1818 = vpack.c.b16 %v1815, %v1814
    %v1819 = vpack.c.b16 %v1817, %v1816
    %v1823 = vsel %vm568, %v1801, 0
    %1825 = vmatpush.bf16.msra.mxu0 0
    %1826 = vmatpush.bf16.msra.mxu0 0
    %1827 = vmatpush.bf16.msra.mxu0 0
    %1828 = vmatpush.bf16.msra.mxu0 0
    %1829 = vmatpush.bf16.msra.mxu0 0
    %1830 = vmatpush.bf16.msra.mxu0 0
    %1831 = vmatpush.bf16.msra.mxu0 %v1819
    %1832 = vmatpush.bf16.msra.mxu0 %v1818
    %1833 = vmatmul.bf16.gmra.mxu0 %v1823
    %v1834 = vpop.f32.mrf.mxu0
    %v1835 = vadd.f32 %v1808, %v1834
    %v1836 = vpop.f32.mrf.mxu0
    %1837 = vdwg.mxu0
    %v1838 = vmax.f32 %v1835, 0.0
    %v1839 = vpack.c.bf16 %v1838, %v1838
    %v1840 = vld [vmem:[#allocation13] sm:$0xf]
    %v1841 = vld [vmem:[#allocation13 + $0x4] sm:$0xf]
    %v1842 = vld [vmem:[#allocation14] sm:$0x1]
    %v1844 = vperm.slane %v1842, 0
    %v1848 = vunpack.c.l.b16 %v1840
    %v1849 = vunpack.c.l.b16 %v1841
    %v1850 = vpack.c.b16 %v1849, %v1848
    %v1853 = vsel %vm823, %v1839, 0
    %1855 = vmatpush.bf16.msra.mxu0 0
    %1856 = vmatpush.bf16.msra.mxu0 0
    %1857 = vmatpush.bf16.msra.mxu0 0
    %1858 = vmatpush.bf16.msra.mxu0 0
    %1859 = vmatpush.bf16.msra.mxu0 0
    %1860 = vmatpush.bf16.msra.mxu0 0
    %1861 = vmatpush.bf16.msra.mxu0 0
    %1862 = vmatpush.bf16.msra.mxu0 %v1850
    %1863 = vmatmul.bf16.gmra.mxu0 %v1853
    %v1864 = vpop.f32.mrf.mxu0
    %v1865 = vadd.f32 %v1844, %v1864
    %v1866 = vpop.f32.mrf.mxu0
    %1867 = vdwg.mxu0
    %vm1868 = vcmask 17408
    %1869 = vst.msk [vmem:[#allocation16] sm:$0x3] %vm1868, %v1865
    // Predicated region
    $region86: #{cnn_lstm_attention_forward.1} parent=1 // pred_check
      _
    $region87: #{cnn_lstm_attention_forward.1} parent=1 // pred_check_branch
      %1871 = sbr.rel (0) target = $region89
    $region88: #{cnn_lstm_attention_forward.1} parent=1 // pred_region
      %1873 = vsyncadd [#allocation4], 0
      %s1875 = sshll.u32 [#allocation16], 4
      %s1876 = int_to_ptr.vmem [resolvable:$true] %s1875
      %s1877 = sshll.u32 %s13, 4
      %s1878 = int_to_ptr.hbm [resolvable:$true] %s1877
      %1880 = dma.vmem_to_hbm [thread:$0]  %s1876, 32, %s1878, [#allocation4]
    $region89: #{cnn_lstm_attention_forward.1} parent=1 // pred_fallthru
      _
    // Predicated region
    $region90: #{cnn_lstm_attention_forward.1} parent=1 // pred_check
      _
    $region91: #{cnn_lstm_attention_forward.1} parent=1 // pred_check_branch
      %1882 = sbr.rel (0) target = $region93
    $region92: #{cnn_lstm_attention_forward.1} parent=1 // pred_region
      %1884 = dma.done [#allocation4], 32
    $region93: #{cnn_lstm_attention_forward.1} parent=1 // pred_fallthru
      _
    %1885 = vsyncpa [#allocation3], 1
    %1886 = vsyncpa [#allocation6], 1
    %1887 = vsyncpa [#allocation9], 1
    %1888 = vsyncpa [#allocation12], 1
    %1889 = vsyncpa [#allocation15], 1
    %1890 = vsyncpa [#allocation4], 1

</llo_original>
